<compile_context>
chip_gen: v6e
topology: v6e:2x2x1
jax: 0.10.0
libtpu: 0.0.40
codegen_flags: <defaults>
</compile_context>

<pallas_src>
import jax
import jax.numpy as jnp
from jax import lax
from jax.experimental import pallas as pl
from jax.experimental.pallas import tpu as pltpu


def _cross_attn3d_kernel(xq_ref, xkv_ref, wq_ref, bq_ref, wkv_ref, bkv_ref,
                         wo_ref, bo_ref, o_ref, k_sc, v_sc):
    i = pl.program_id(1)
    M = k_sc.shape[-1]

    # K/V projection: one N=2M matmul, computed once per batch (inner q-tile axis
    # is "arbitrary"), kept resident in bf16 VMEM scratch for every q tile.
    @pl.when(i == 0)
    def _():
        xkv = xkv_ref[0]                                              # (S, Cc), bf16
        kv = jnp.dot(xkv, wkv_ref[...],
                     preferred_element_type=jnp.float32) + bkv_ref[...]
        k_sc[...] = kv[:, :M].astype(k_sc.dtype)
        v_sc[...] = kv[:, M:].astype(v_sc.dtype)

    # Q projection (softmax scale already folded into wq/bq on the host).
    xq = xq_ref[0]                                                    # (tq, Cq), bf16
    q = (jnp.dot(xq, wq_ref[...], preferred_element_type=jnp.float32)
         + bq_ref[...]).astype(k_sc.dtype)                            # bf16 MXU operand

    k = k_sc[...]
    v = v_sc[...]

    # NT matmul: contract dim 1 of q with dim 1 of k -> no in-kernel transpose.
    sim = lax.dot_general(q, k, (((1,), (1,)), ((), ())),
                          preferred_element_type=jnp.float32)         # (tq, S), f32

    # Numerically-stable softmax, kept in f32 (safe on v5e).
    # TODO(synk): on v6e/v7x the exp could run in bf16 to halve EUP work.
    sim = sim - jnp.max(sim, axis=-1, keepdims=True)
    p = jnp.exp(sim)
    p = p * pl.reciprocal(jnp.sum(p, axis=-1, keepdims=True), approx=True)

    # TODO(synk): dropout on `p` for drop_prob > 0 (module default 0.0 -> identity).
    attn = jnp.dot(p.astype(v.dtype), v,
                   preferred_element_type=jnp.float32)                # (tq, M), f32

    # Output 1x1 conv.
    y = jnp.dot(attn.astype(wo_ref.dtype), wo_ref[...],
                preferred_element_type=jnp.float32) + bo_ref[...]
    o_ref[0] = y.astype(o_ref.dtype)


def _q_tile(S, sim_budget_bytes):
    """Largest power-of-two q tile whose f32 softmax temporaries fit the budget."""
    tq = min(1024, max(8, pl.next_power_of_2(S)))
    while tq > 8 and 3 * tq * S * 4 > sim_budget_bytes:
        tq //= 2
    return tq


def _vmem_bytes(S, tq, Cq, Cc, M, Co, act_bytes, out_bytes):
    scratch = 2 * S * M * act_bytes                          # k_sc + v_sc
    xkv_buf = 2 * S * Cc * act_bytes                         # double-buffered x_kv block
    xq_buf = 2 * tq * Cq * act_bytes                         # double-buffered x_q tile
    out_buf = 2 * tq * Co * out_bytes                        # double-buffered output tile
    weights = 2 * ((Cq * M + Cc * 2 * M + M * Co) * act_bytes + (3 * M + Co) * 4)
    temps = 3 * tq * S * 4 + 4 * tq * M * 4 + 2 * S * M * 4  # sim/p + q/attn + kv f32
    return scratch + xkv_buf + xq_buf + out_buf + weights + temps


def cross_attention_3d(x_q, params, x_kv=None, *, mxu_dtype=jnp.bfloat16,
                       sim_budget_bytes=8 << 20):
    """Pallas forward of CrossAttention3D (separate=True, drop_prob=0)."""
    if x_kv is None:                       # get_qkv: k = v = q when not supplied
        x_kv = x_q
    B, Cq, H, W = x_q.shape
    Cc = x_kv.shape[1]
    S = H * W
    M = params["wq"].shape[1]              # model_dim
    Co = params["wo"].shape[1]             # query_dim (output channels)

    # One-time host-side param prep: fold the softmax scale into wq/bq,
    # concatenate wk||wv and bk||bv, cast MXU weights to bf16 (biases stay f32
    # because they are added to the f32 accumulators).
    scale = float(M) ** -0.5
    wq = (params["wq"] * scale).astype(mxu_dtype)
    bq = (params["bq"] * scale).astype(jnp.float32)
    wkv = jnp.concatenate([params["wk"], params["wv"]], axis=1).astype(mxu_dtype)
    bkv = jnp.concatenate([params["bk"], params["bv"]], axis=1).astype(jnp.float32)
    wo = params["wo"].astype(mxu_dtype)
    bo = params["bo"].astype(jnp.float32)

    # 'b c h w -> b (h w) c' (+ bf16 cast fused into the same XLA op).
    # TODO(synk): feed (B, C, S) directly with a TN projection contraction to drop
    # these wrapper transposes once verified transpose-free in the Mosaic lowering.
    xq_seq = x_q.reshape(B, Cq, S).transpose(0, 2, 1).astype(mxu_dtype)
    xkv_seq = x_kv.reshape(B, Cc, S).transpose(0, 2, 1).astype(mxu_dtype)

    tq = _q_tile(S, sim_budget_bytes)
    n_q = -(-S // tq)
    Sq = n_q * tq
    if Sq != S:                            # pad q rows only; keys stay at full S
        xq_seq = jnp.pad(xq_seq, ((0, 0), (0, Sq - S), (0, 0)))

    out_dtype = x_q.dtype
    est = _vmem_bytes(S, tq, Cq, Cc, M, Co,
                      jnp.dtype(mxu_dtype).itemsize, jnp.dtype(out_dtype).itemsize)
    vmem_limit = int(min(max(2 * est, 32 * 1024 * 1024), 64 * 1024 * 1024))

    const = lambda b, i: (0, 0)
    y_seq = pl.pallas_call(
        _cross_attn3d_kernel,
        out_shape=jax.ShapeDtypeStruct((B, Sq, Co), out_dtype),
        grid=(B, n_q),
        in_specs=[
            pl.BlockSpec((1, tq, Cq), lambda b, i: (b, i, 0)),   # x_q tile
            pl.BlockSpec((1, S, Cc), lambda b, i: (b, 0, 0)),    # x_kv (DMA deduped over i)
            pl.BlockSpec((Cq, M), const),                        # wq (scale folded)
            pl.BlockSpec((1, M), const),                         # bq (scale folded)
            pl.BlockSpec((Cc, 2 * M), const),                    # wk || wv
            pl.BlockSpec((1, 2 * M), const),                     # bk || bv
            pl.BlockSpec((M, Co), const),                        # wo
            pl.BlockSpec((1, Co), const),                        # bo
        ],
        out_specs=pl.BlockSpec((1, tq, Co), lambda b, i: (b, i, 0)),
        scratch_shapes=[
            pltpu.VMEM((S, M), mxu_dtype),   # projected K, resident per batch
            pltpu.VMEM((S, M), mxu_dtype),   # projected V
        ],
        compiler_params=pltpu.CompilerParams(
            dimension_semantics=("parallel", "arbitrary"),
            vmem_limit_bytes=vmem_limit),
        # TODO(synk): for long S, switch the inner axis to flash/online-softmax KV
        # tiling so the (tq, S) sim and full-S K/V scratch never materialize
        # (needed to fit v7x's 64 MiB VMEM at long context).
    )(xq_seq, xkv_seq, wq, bq, wkv, bkv, wo, bo)

    if Sq != S:
        y_seq = y_seq[:, :S, :]
    # 'b (h w) c -> b c h w'
    return y_seq.transpose(0, 2, 1).reshape(B, Co, H, W)


def _reference(x_q, params, x_kv=None):
    """Pure-JAX f32 mirror of the PyTorch CrossAttention3D.forward."""
    if x_kv is None:
        x_kv = x_q
    B, Cq, H, W = x_q.shape
    Cc = x_kv.shape[1]
    S = H * W
    Co = params["wo"].shape[1]

    xq = x_q.reshape(B, Cq, S).transpose(0, 2, 1)
    xkv = x_kv.reshape(B, Cc, S).transpose(0, 2, 1)

    q = xq @ params["wq"] + params["bq"]            # (B, S, M)
    k = xkv @ params["wk"] + params["bk"]
    v = xkv @ params["wv"] + params["bv"]

    scale = q.shape[-1] ** (-0.5)                   # ScaleAttend: q.shape[-1] ** -0.5
    sim = jnp.einsum("bid,bjd->bij", q, k) * scale
    attn = jax.nn.softmax(sim, axis=-1)
    out = jnp.einsum("bij,bjd->bid", attn, v)

    y = out @ params["wo"] + params["bo"]           # (B, S, Co)
    return y.transpose(0, 2, 1).reshape(B, Co, H, W)


if __name__ == "__main__":
    key = jax.random.PRNGKey(0)
    ks = jax.random.split(key, 10)

    # Module config: n_heads=4, head_dim=32 -> model_dim=128;
    # query_dim = context_dim = model_dim (module defaults).  Spatial 16x16 -> S=256.
    B, Hs, Ws = 2, 16, 16
    n_heads, head_dim = 4, 32
    model_dim = n_heads * head_dim
    query_dim = context_dim = model_dim

    x_q = jax.random.normal(ks[0], (B, query_dim, Hs, Ws), jnp.float32)
    x_kv = jax.random.normal(ks[1], (B, context_dim, Hs, Ws), jnp.float32)

    def w(k, shape, fan_in):
        return jax.random.normal(k, shape, jnp.float32) * (fan_in ** -0.5)

    params = {
        "wq": w(ks[2], (query_dim, model_dim), query_dim),
        "bq": w(ks[3], (1, model_dim), model_dim),
        "wk": w(ks[4], (context_dim, model_dim), context_dim),
        "bk": w(ks[5], (1, model_dim), model_dim),
        "wv": w(ks[6], (context_dim, model_dim), context_dim),
        "bv": w(ks[7], (1, model_dim), model_dim),
        "wo": w(ks[8], (model_dim, query_dim), model_dim),
        "bo": w(ks[9], (1, query_dim), query_dim),
    }

    out = cross_attention_3d(x_q, params, x_kv)
    jax.block_until_ready(out)

    ref = _reference(x_q, params, x_kv)
    assert out.shape == (B, query_dim, Hs, Ws)
    # bf16 MXU operands + EUP approx reciprocal -> relaxed tolerance vs the exact
    # f32 reference.
    assert jnp.allclose(out, ref, atol=5e-2, rtol=5e-2), float(jnp.max(jnp.abs(out - ref)))

    print("KERNEL_OK")
</pallas_src>

<mosaic_0001>
module attributes {stable_mosaic.version = 11 : i64} {
  func.func @_cross_attn3d_kernel(%arg0: i32, %arg1: i32, %arg2: memref<1x256x128xbf16, #tpu.memory_space<vmem>>, %arg3: memref<1x256x128xbf16, #tpu.memory_space<vmem>>, %arg4: memref<128x128xbf16, #tpu.memory_space<vmem>>, %arg5: memref<1x128xf32, #tpu.memory_space<vmem>>, %arg6: memref<128x256xbf16, #tpu.memory_space<vmem>>, %arg7: memref<1x256xf32, #tpu.memory_space<vmem>>, %arg8: memref<128x128xbf16, #tpu.memory_space<vmem>>, %arg9: memref<1x128xf32, #tpu.memory_space<vmem>>, %arg10: memref<1x256x128xf32, #tpu.memory_space<vmem>>, %arg11: memref<256x128xbf16, #tpu.memory_space<vmem>>, %arg12: memref<256x128xbf16, #tpu.memory_space<vmem>>) attributes {dimension_semantics = [#tpu.dimension_semantics<parallel>, #tpu.dimension_semantics<arbitrary>], iteration_bounds = array<i64: 2, 1>, scalar_prefetch = 0 : i64, scratch_operands = 2 : i64, tpu.core_type = #tpu.core_type<tc>, window_params = [{transform_indices = @transform_0, window_bounds = array<i64: 1, 256, 128>}, {transform_indices = @transform_1, window_bounds = array<i64: 1, 256, 128>}, {pipeline_mode = #tpu.pipeline_mode<synchronous>, transform_indices = @transform_2, window_bounds = array<i64: 128, 128>}, {pipeline_mode = #tpu.pipeline_mode<synchronous>, transform_indices = @transform_3, window_bounds = array<i64: 1, 128>}, {pipeline_mode = #tpu.pipeline_mode<synchronous>, transform_indices = @transform_4, window_bounds = array<i64: 128, 256>}, {pipeline_mode = #tpu.pipeline_mode<synchronous>, transform_indices = @transform_5, window_bounds = array<i64: 1, 256>}, {pipeline_mode = #tpu.pipeline_mode<synchronous>, transform_indices = @transform_6, window_bounds = array<i64: 128, 128>}, {pipeline_mode = #tpu.pipeline_mode<synchronous>, transform_indices = @transform_7, window_bounds = array<i64: 1, 128>}, {transform_indices = @transform_8, window_bounds = array<i64: 1, 256, 128>}]} {
    %c0_i32 = arith.constant 0 : i32
    %0 = arith.cmpi eq, %arg1, %c0_i32 : i32
    %1 = arith.extui %0 : i1 to i32
    %c0_i32_0 = arith.constant 0 : i32
    %2 = arith.cmpi ne, %1, %c0_i32_0 : i32
    scf.if %2 {
      %c0_23 = arith.constant 0 : index
      %c0_24 = arith.constant 0 : index
      %c0_25 = arith.constant 0 : index
      %35 = vector.load %arg3[%c0_23, %c0_24, %c0_25] : memref<1x256x128xbf16, #tpu.memory_space<vmem>>, vector<1x256x128xbf16>
      %36 = vector.shape_cast %35 : vector<1x256x128xbf16> to vector<256x128xbf16>
      %c0_26 = arith.constant 0 : index
      %c0_27 = arith.constant 0 : index
      %37 = vector.load %arg6[%c0_26, %c0_27] : memref<128x256xbf16, #tpu.memory_space<vmem>>, vector<128x256xbf16>
      %cst_28 = arith.constant dense<0.000000e+00> : vector<256x256xf32>
      %38 = tpu.matmul %36, %37, %cst_28 {dimension_numbers = #tpu.dot_dimension_numbers<[1], [0], [0], [1], [0, 0, 1, 1], [], []>} : vector<256x128xbf16>, vector<128x256xbf16>, vector<256x256xf32> -> vector<256x256xf32>
      %c0_29 = arith.constant 0 : index
      %c0_30 = arith.constant 0 : index
      %39 = vector.load %arg7[%c0_29, %c0_30] : memref<1x256xf32, #tpu.memory_space<vmem>>, vector<1x256xf32>
      %40 = vector.broadcast %39 : vector<1x256xf32> to vector<256x256xf32>
      %41 = arith.addf %38, %40 : vector<256x256xf32>
      %42 = vector.extract_strided_slice %41 {offsets = [0, 0], sizes = [256, 128], strides = [1, 1]} : vector<256x256xf32> to vector<256x128xf32>
      %43 = arith.truncf %42 : vector<256x128xf32> to vector<256x128xbf16>
      %c0_31 = arith.constant 0 : index
      %c0_32 = arith.constant 0 : index
      %44 = vector.load %arg11[%c0_31, %c0_32] : memref<256x128xbf16, #tpu.memory_space<vmem>>, vector<256x128xbf16>
      tpu.vector_store %arg11[%c0_31, %c0_32], %43 {strides = array<i32>} : memref<256x128xbf16, #tpu.memory_space<vmem>>, vector<256x128xbf16>,
      %45 = vector.extract_strided_slice %41 {offsets = [0, 128], sizes = [256, 128], strides = [1, 1]} : vector<256x256xf32> to vector<256x128xf32>
      %46 = arith.truncf %45 : vector<256x128xf32> to vector<256x128xbf16>
      %c0_33 = arith.constant 0 : index
      %c0_34 = arith.constant 0 : index
      %47 = vector.load %arg12[%c0_33, %c0_34] : memref<256x128xbf16, #tpu.memory_space<vmem>>, vector<256x128xbf16>
      tpu.vector_store %arg12[%c0_33, %c0_34], %46 {strides = array<i32>} : memref<256x128xbf16, #tpu.memory_space<vmem>>, vector<256x128xbf16>,
    } else {
    }
    %c0 = arith.constant 0 : index
    %c0_1 = arith.constant 0 : index
    %c0_2 = arith.constant 0 : index
    %3 = vector.load %arg2[%c0, %c0_1, %c0_2] : memref<1x256x128xbf16, #tpu.memory_space<vmem>>, vector<1x256x128xbf16>
    %4 = vector.shape_cast %3 : vector<1x256x128xbf16> to vector<256x128xbf16>
    %c0_3 = arith.constant 0 : index
    %c0_4 = arith.constant 0 : index
    %5 = vector.load %arg4[%c0_3, %c0_4] : memref<128x128xbf16, #tpu.memory_space<vmem>>, vector<128x128xbf16>
    %cst = arith.constant dense<0.000000e+00> : vector<256x128xf32>
    %6 = tpu.matmul %4, %5, %cst {dimension_numbers = #tpu.dot_dimension_numbers<[1], [0], [0], [1], [0, 0, 1, 1], [], []>} : vector<256x128xbf16>, vector<128x128xbf16>, vector<256x128xf32> -> vector<256x128xf32>
    %c0_5 = arith.constant 0 : index
    %c0_6 = arith.constant 0 : index
    %7 = vector.load %arg5[%c0_5, %c0_6] : memref<1x128xf32, #tpu.memory_space<vmem>>, vector<1x128xf32>
    %8 = vector.broadcast %7 : vector<1x128xf32> to vector<256x128xf32>
    %9 = arith.addf %6, %8 : vector<256x128xf32>
    %10 = arith.truncf %9 : vector<256x128xf32> to vector<256x128xbf16>
    %c0_7 = arith.constant 0 : index
    %c0_8 = arith.constant 0 : index
    %11 = vector.load %arg11[%c0_7, %c0_8] : memref<256x128xbf16, #tpu.memory_space<vmem>>, vector<256x128xbf16>
    %c0_9 = arith.constant 0 : index
    %c0_10 = arith.constant 0 : index
    %12 = vector.load %arg12[%c0_9, %c0_10] : memref<256x128xbf16, #tpu.memory_space<vmem>>, vector<256x128xbf16>
    %cst_11 = arith.constant dense<0.000000e+00> : vector<256x256xf32>
    %13 = tpu.matmul %10, %11, %cst_11 {dimension_numbers = #tpu.dot_dimension_numbers<[1], [1], [0], [0], [0, 0, 1, 0], [], []>} : vector<256x128xbf16>, vector<256x128xbf16>, vector<256x256xf32> -> vector<256x256xf32>
    %cst_12 = arith.constant dense<0xFF800000> : vector<256xf32>
    %14 = vector.multi_reduction <maximumf>, %13, %cst_12 [1] : vector<256x256xf32> to vector<256xf32>
    %15 = vector.shape_cast %14 : vector<256xf32> to vector<256x1xf32>
    %16 = vector.broadcast %15 : vector<256x1xf32> to vector<256x256xf32>
    %17 = arith.subf %13, %16 : vector<256x256xf32>
    %18 = math.exp %17 : vector<256x256xf32>
    %cst_13 = arith.constant dense<0.000000e+00> : vector<256xf32>
    %19 = vector.multi_reduction <add>, %18, %cst_13 [1] : vector<256x256xf32> to vector<256xf32>
    %20 = vector.shape_cast %19 : vector<256xf32> to vector<256x1xf32>
    %21 = tpu.reciprocal %20 {approx = true} : vector<256x1xf32> -> vector<256x1xf32>
    %22 = vector.broadcast %21 : vector<256x1xf32> to vector<256x256xf32>
    %23 = arith.mulf %18, %22 : vector<256x256xf32>
    %24 = arith.truncf %23 : vector<256x256xf32> to vector<256x256xbf16>
    %cst_14 = arith.constant dense<0.000000e+00> : vector<256x128xf32>
    %25 = tpu.matmul %24, %12, %cst_14 {dimension_numbers = #tpu.dot_dimension_numbers<[1], [0], [0], [1], [0, 0, 1, 1], [], []>} : vector<256x256xbf16>, vector<256x128xbf16>, vector<256x128xf32> -> vector<256x128xf32>
    %26 = arith.truncf %25 : vector<256x128xf32> to vector<256x128xbf16>
    %c0_15 = arith.constant 0 : index
    %c0_16 = arith.constant 0 : index
    %27 = vector.load %arg8[%c0_15, %c0_16] : memref<128x128xbf16, #tpu.memory_space<vmem>>, vector<128x128xbf16>
    %cst_17 = arith.constant dense<0.000000e+00> : vector<256x128xf32>
    %28 = tpu.matmul %26, %27, %cst_17 {dimension_numbers = #tpu.dot_dimension_numbers<[1], [0], [0], [1], [0, 0, 1, 1], [], []>} : vector<256x128xbf16>, vector<128x128xbf16>, vector<256x128xf32> -> vector<256x128xf32>
    %c0_18 = arith.constant 0 : index
    %c0_19 = arith.constant 0 : index
    %29 = vector.load %arg9[%c0_18, %c0_19] : memref<1x128xf32, #tpu.memory_space<vmem>>, vector<1x128xf32>
    %30 = vector.broadcast %29 : vector<1x128xf32> to vector<256x128xf32>
    %31 = arith.addf %28, %30 : vector<256x128xf32>
    %c0_20 = arith.constant 0 : index
    %c0_21 = arith.constant 0 : index
    %c0_22 = arith.constant 0 : index
    %32 = vector.load %arg10[%c0_20, %c0_21, %c0_22] : memref<1x256x128xf32, #tpu.memory_space<vmem>>, vector<1x256x128xf32>
    %33 = vector.shape_cast %32 : vector<1x256x128xf32> to vector<256x128xf32>
    %34 = vector.shape_cast %31 : vector<256x128xf32> to vector<1x256x128xf32>
    tpu.vector_store %arg10[%c0_20, %c0_21, %c0_22], %34 {strides = array<i32>} : memref<1x256x128xf32, #tpu.memory_space<vmem>>, vector<1x256x128xf32>,
    return
  }
  func.func @transform_0(%arg0: i32, %arg1: i32) -> (i32, i32, i32) {
    %c0_i32 = arith.constant 0 : i32
    %c0_i32_0 = arith.constant 0 : i32
    return %arg0, %arg1, %c0_i32 : i32, i32, i32
  }
  func.func @transform_1(%arg0: i32, %arg1: i32) -> (i32, i32, i32) {
    %c0_i32 = arith.constant 0 : i32
    %c0_i32_0 = arith.constant 0 : i32
    %c0_i32_1 = arith.constant 0 : i32
    return %arg0, %c0_i32, %c0_i32_0 : i32, i32, i32
  }
  func.func @transform_2(%arg0: i32, %arg1: i32) -> (i32, i32) {
    %c0_i32 = arith.constant 0 : i32
    %c0_i32_0 = arith.constant 0 : i32
    %c0_i32_1 = arith.constant 0 : i32
    return %c0_i32, %c0_i32_0 : i32, i32
  }
  func.func @transform_3(%arg0: i32, %arg1: i32) -> (i32, i32) {
    %c0_i32 = arith.constant 0 : i32
    %c0_i32_0 = arith.constant 0 : i32
    %c0_i32_1 = arith.constant 0 : i32
    return %c0_i32, %c0_i32_0 : i32, i32
  }
  func.func @transform_4(%arg0: i32, %arg1: i32) -> (i32, i32) {
    %c0_i32 = arith.constant 0 : i32
    %c0_i32_0 = arith.constant 0 : i32
    %c0_i32_1 = arith.constant 0 : i32
    return %c0_i32, %c0_i32_0 : i32, i32
  }
  func.func @transform_5(%arg0: i32, %arg1: i32) -> (i32, i32) {
    %c0_i32 = arith.constant 0 : i32
    %c0_i32_0 = arith.constant 0 : i32
    %c0_i32_1 = arith.constant 0 : i32
    return %c0_i32, %c0_i32_0 : i32, i32
  }
  func.func @transform_6(%arg0: i32, %arg1: i32) -> (i32, i32) {
    %c0_i32 = arith.constant 0 : i32
    %c0_i32_0 = arith.constant 0 : i32
    %c0_i32_1 = arith.constant 0 : i32
    return %c0_i32, %c0_i32_0 : i32, i32
  }
  func.func @transform_7(%arg0: i32, %arg1: i32) -> (i32, i32) {
    %c0_i32 = arith.constant 0 : i32
    %c0_i32_0 = arith.constant 0 : i32
    %c0_i32_1 = arith.constant 0 : i32
    return %c0_i32, %c0_i32_0 : i32, i32
  }
  func.func @transform_8(%arg0: i32, %arg1: i32) -> (i32, i32, i32) {
    %c0_i32 = arith.constant 0 : i32
    %c0_i32_0 = arith.constant 0 : i32
    return %arg0, %arg1, %c0_i32 : i32, i32, i32
  }
}

</mosaic_0001>

<llo_original>
// kernel: tpu_custom_call.1
$region0: #{tpu_custom_call.1}
  #allocation0 [shape = 'u32[]', space=smem, size = 0x4, offset = 0x4, fixed_abs, tag = 'smem constant byte address 0x4 - core index']
  #allocation1 [shape = 'u32[144,128]{1,0:T(1,128)}', space=vmem, size = 0x12000, scoped, tag = 'internal scratch']
  #allocation2 [shape = 'bf16[256,128]{1,0:T(8,128)(2,1)}', space=vmem, size = 0x10000, scoped, tag = 'scratch operand']
  #allocation3 [shape = 'bf16[256,128]{1,0:T(8,128)(2,1)}', space=vmem, size = 0x10000, scoped, tag = 'scratch operand']
  %s0 = inlined_call_operand.hbm [shape: bf16[2,256,128], index: 0, kind: input, shape index: {}]
  %s1 = inlined_call_operand.hbm [shape: bf16[2,256,128], index: 1, kind: input, shape index: {}]
  %s2 = inlined_call_operand.hbm [shape: bf16[128,128], index: 2, kind: input, shape index: {}]
  %s3 = inlined_call_operand.vmem [shape: f32[1,128], index: 3, kind: input, shape index: {}]
  %s4 = inlined_call_operand.hbm [shape: bf16[128,256], index: 4, kind: input, shape index: {}]
  %s5 = inlined_call_operand.vmem [shape: f32[1,256], index: 5, kind: input, shape index: {}]
  %s6 = inlined_call_operand.hbm [shape: bf16[128,128], index: 6, kind: input, shape index: {}]
  %s7 = inlined_call_operand.vmem [shape: f32[1,128], index: 7, kind: input, shape index: {}]
  %s8 = inlined_call_operand.hbm [shape: f32[2,256,128], index: 8, kind: output, shape index: {}]
  %s9 = sld [smem:[#allocation0]]
  $region89: #{tpu_custom_call.1} parent=0
    _
  %s11 = ssub.s32 1, %s9
  %s12 = scalar_select 0, %s11, %s9
  $region1: #{tpu_custom_call.1} parent=0
    #allocation4 [shape = 'u8[131072]{0}', space=vmem, size = 0x20000, scoped, tag = 'input window, operand 0']
    #allocation5 [shape = 's32[2]{0}', space=sflag, size = 0x8, scoped, tag = 'scoped memory for tpu_custom_call.1']
    #allocation6 [shape = 's32[2]{0}', space=sflag, size = 0x8, scoped, tag = 'scoped memory for tpu_custom_call.1']
    #allocation7 [shape = 'u8[131072]{0}', space=vmem, size = 0x20000, scoped, tag = 'input window, operand 1']
    #allocation8 [shape = 's32[2]{0}', space=sflag, size = 0x8, scoped, tag = 'scoped memory for tpu_custom_call.1']
    #allocation9 [shape = 'u8[32768]{0}', space=vmem, size = 0x8000, scoped, tag = 'input window, operand 2, single buffered']
    #allocation10 [shape = 'u8[65536]{0}', space=vmem, size = 0x10000, scoped, tag = 'input window, operand 4, single buffered']
    #allocation11 [shape = 's32[1]{0}', space=sflag, size = 0x4, scoped, tag = 'scoped memory for tpu_custom_call.1']
    #allocation12 [shape = 'u8[32768]{0}', space=vmem, size = 0x8000, scoped, tag = 'input window, operand 6, single buffered']
    #allocation13 [shape = 'u8[262144]{0}', space=vmem, size = 0x40000, scoped, tag = 'output window, operand 0']
    %13 = vsyncpa [#allocation5], 0
    %s14 = scalar_lea.sflag [#allocation5], 1
    %15 = vsyncpa %s14, 0
    %16 = vsyncpa [#allocation8], 0
    %s17 = scalar_lea.sflag [#allocation8], 1
    %18 = vsyncpa %s17, 0
    %19 = vsyncpa [#allocation11], 0
    %20 = vsyncpa [#allocation6], 0
    %s21 = scalar_lea.sflag [#allocation6], 1
    %22 = vsyncpa %s21, 0
    loop: start=0, step=1, limit=4
    $region2: #{tpu_custom_call.1} parent=1 // loop_pre_header
      _
    $region3: #{tpu_custom_call.1} parent=1 // loop_header
      %s24 = sphi 0, %s28
      %p25 = scmp.ge.s32.totalorder %s24, 4
      %s31 = sphi 0, %s43
      %s32 = sphi 0, %s39
      %s33 = sphi 0, %s31
      %s34 = sphi 0, %s32
      %s35 = sphi 0, %s33
      %s36 = sphi 0, %s34
      %s48 = sphi 0, %s50
      %s51 = sphi 0, %s48
      %s52 = sphi 0, %s51
      %s68 = sphi 0, %s52
      %s74 = sphi 0, %s76
      %s77 = sphi 0, %s74
      %s78 = sphi 0, %s77
      %s94 = sphi 0, %s78
      %s98 = sphi 0, %s98
      %s100 = sphi 0, %s98
      %s101 = sphi 0, %s100
      %s115 = sphi 0, %s101
      %s119 = sphi 0, %s119
      %s121 = sphi 0, %s119
      %s122 = sphi 0, %s121
      %s136 = sphi 0, %s122
      %s140 = sphi 0, %s140
      %s142 = sphi 0, %s140
      %s143 = sphi 0, %s142
      %s157 = sphi 0, %s143
      %s161 = sphi 0, %s161
      %s163 = sphi 0, %s161
      %s164 = sphi 0, %s163
      %s178 = sphi 0, %s164
      %s182 = sphi 0, %s182
      %s184 = sphi 0, %s182
      %s185 = sphi 0, %s184
      %s199 = sphi 0, %s185
      %s203 = sphi 0, %s203
      %s205 = sphi 0, %s203
      %s206 = sphi 0, %s205
      %s220 = sphi 0, %s206
      %s228 = sphi 0, %s230
      %s231 = sphi 0, %s228
      %s232 = sphi 0, %s231
      %s248 = sphi 0, %s232
    $region4: #{tpu_custom_call.1} parent=1 // loop_header_branch
      %27 = sbr.rel (%p25) target = $region8
    $region5: #{tpu_custom_call.1} parent=1 // loop_body
      %s29 = ssub.s32 %s24, 1
      %s30 = ssub.s32 %s24, 2
      %s37 = sadd.s32 1, %s32
      %p38 = scmp.ge.s32.totalorder %s37, 1
      %s39 = scalar_select %p38, 0, %s37
      %s40 = sadd.s32 1, %s31
      %s41 = scalar_select %p38, %s40, %s31
      %p42 = scmp.ge.s32.totalorder %s41, 2
      %s43 = scalar_select %p42, 0, %s41
      %s44 = ssub.s32 %s31, %s43
      %s45 = ssub.s32 %s32, %s39
      %s46 = sor.u32 %s44, %s45
      %p47 = scmp.eq.s32.totalorder %s46, 0
      %s49 = sadd.s32 %s48, 1
      %s50 = scalar_select %p47, %s48, %s49
      %p53 = pneg %p47
      %p54 = scmp.eq.s32.totalorder %s24, 1
      %p55 = por %p53, %p54
      %p56 = scmp.ne.s32.totalorder %s48, %s51
      %p57 = scmp.eq.s32.totalorder %s24, 0
      %p58 = por %p56, %p57
      %p59 = scmp.ne.s32.totalorder %s48, %s51
      %p60 = scmp.eq.s32.totalorder %s29, 1
      %p61 = por %p59, %p60
      %p62 = scmp.ne.s32.totalorder %s51, %s52
      %p63 = scmp.eq.s32.totalorder %s29, 0
      %p64 = por %p62, %p63
      %p65 = scmp.ne.s32.totalorder %s51, %s52
      %p66 = scmp.eq.s32.totalorder %s30, 1
      %p67 = por %p65, %p66
      %p69 = scmp.ne.s32.totalorder %s52, %s68
      %p70 = scmp.eq.s32.totalorder %s30, 0
      %p71 = por %p69, %p70
      %s72 = ssub.s32 %s31, %s43
      %p73 = scmp.eq.s32.totalorder %s72, 0
      %s75 = sadd.s32 %s74, 1
      %s76 = scalar_select %p73, %s74, %s75
      %p79 = pneg %p73
      %p80 = scmp.eq.s32.totalorder %s24, 1
      %p81 = por %p79, %p80
      %p82 = scmp.ne.s32.totalorder %s74, %s77
      %p83 = scmp.eq.s32.totalorder %s24, 0
      %p84 = por %p82, %p83
      %p85 = scmp.ne.s32.totalorder %s74, %s77
      %p86 = scmp.eq.s32.totalorder %s29, 1
      %p87 = por %p85, %p86
      %p88 = scmp.ne.s32.totalorder %s77, %s78
      %p89 = scmp.eq.s32.totalorder %s29, 0
      %p90 = por %p88, %p89
      %p91 = scmp.ne.s32.totalorder %s77, %s78
      %p92 = scmp.eq.s32.totalorder %s30, 1
      %p93 = por %p91, %p92
      %p95 = scmp.ne.s32.totalorder %s78, %s94
      %p96 = scmp.eq.s32.totalorder %s30, 0
      %p97 = por %p95, %p96
      %s99 = sadd.s32 %s98, 1
      %p102 = scmp.eq.s32.totalorder %s24, 1
      %p103 = scmp.ne.s32.totalorder %s98, %s100
      %p104 = scmp.eq.s32.totalorder %s24, 0
      %p105 = por %p103, %p104
      %p106 = scmp.ne.s32.totalorder %s98, %s100
      %p107 = scmp.eq.s32.totalorder %s29, 1
      %p108 = por %p106, %p107
      %p109 = scmp.ne.s32.totalorder %s100, %s101
      %p110 = scmp.eq.s32.totalorder %s29, 0
      %p111 = por %p109, %p110
      %p112 = scmp.ne.s32.totalorder %s100, %s101
      %p113 = scmp.eq.s32.totalorder %s30, 1
      %p114 = por %p112, %p113
      %p116 = scmp.ne.s32.totalorder %s101, %s115
      %p117 = scmp.eq.s32.totalorder %s30, 0
      %p118 = por %p116, %p117
      %s120 = sadd.s32 %s119, 1
      %p123 = scmp.eq.s32.totalorder %s24, 1
      %p124 = scmp.ne.s32.totalorder %s119, %s121
      %p125 = scmp.eq.s32.totalorder %s24, 0
      %p126 = por %p124, %p125
      %p127 = scmp.ne.s32.totalorder %s119, %s121
      %p128 = scmp.eq.s32.totalorder %s29, 1
      %p129 = por %p127, %p128
      %p130 = scmp.ne.s32.totalorder %s121, %s122
      %p131 = scmp.eq.s32.totalorder %s29, 0
      %p132 = por %p130, %p131
      %p133 = scmp.ne.s32.totalorder %s121, %s122
      %p134 = scmp.eq.s32.totalorder %s30, 1
      %p135 = por %p133, %p134
      %p137 = scmp.ne.s32.totalorder %s122, %s136
      %p138 = scmp.eq.s32.totalorder %s30, 0
      %p139 = por %p137, %p138
      %s141 = sadd.s32 %s140, 1
      %p144 = scmp.eq.s32.totalorder %s24, 1
      %p145 = scmp.ne.s32.totalorder %s140, %s142
      %p146 = scmp.eq.s32.totalorder %s24, 0
      %p147 = por %p145, %p146
      %p148 = scmp.ne.s32.totalorder %s140, %s142
      %p149 = scmp.eq.s32.totalorder %s29, 1
      %p150 = por %p148, %p149
      %p151 = scmp.ne.s32.totalorder %s142, %s143
      %p152 = scmp.eq.s32.totalorder %s29, 0
      %p153 = por %p151, %p152
      %p154 = scmp.ne.s32.totalorder %s142, %s143
      %p155 = scmp.eq.s32.totalorder %s30, 1
      %p156 = por %p154, %p155
      %p158 = scmp.ne.s32.totalorder %s143, %s157
      %p159 = scmp.eq.s32.totalorder %s30, 0
      %p160 = por %p158, %p159
      %s162 = sadd.s32 %s161, 1
      %p165 = scmp.eq.s32.totalorder %s24, 1
      %p166 = scmp.ne.s32.totalorder %s161, %s163
      %p167 = scmp.eq.s32.totalorder %s24, 0
      %p168 = por %p166, %p167
      %p169 = scmp.ne.s32.totalorder %s161, %s163
      %p170 = scmp.eq.s32.totalorder %s29, 1
      %p171 = por %p169, %p170
      %p172 = scmp.ne.s32.totalorder %s163, %s164
      %p173 = scmp.eq.s32.totalorder %s29, 0
      %p174 = por %p172, %p173
      %p175 = scmp.ne.s32.totalorder %s163, %s164
      %p176 = scmp.eq.s32.totalorder %s30, 1
      %p177 = por %p175, %p176
      %p179 = scmp.ne.s32.totalorder %s164, %s178
      %p180 = scmp.eq.s32.totalorder %s30, 0
      %p181 = por %p179, %p180
      %s183 = sadd.s32 %s182, 1
      %p186 = scmp.eq.s32.totalorder %s24, 1
      %p187 = scmp.ne.s32.totalorder %s182, %s184
      %p188 = scmp.eq.s32.totalorder %s24, 0
      %p189 = por %p187, %p188
      %p190 = scmp.ne.s32.totalorder %s182, %s184
      %p191 = scmp.eq.s32.totalorder %s29, 1
      %p192 = por %p190, %p191
      %p193 = scmp.ne.s32.totalorder %s184, %s185
      %p194 = scmp.eq.s32.totalorder %s29, 0
      %p195 = por %p193, %p194
      %p196 = scmp.ne.s32.totalorder %s184, %s185
      %p197 = scmp.eq.s32.totalorder %s30, 1
      %p198 = por %p196, %p197
      %p200 = scmp.ne.s32.totalorder %s185, %s199
      %p201 = scmp.eq.s32.totalorder %s30, 0
      %p202 = por %p200, %p201
      %s204 = sadd.s32 %s203, 1
      %p207 = scmp.eq.s32.totalorder %s24, 1
      %p208 = scmp.ne.s32.totalorder %s203, %s205
      %p209 = scmp.eq.s32.totalorder %s24, 0
      %p210 = por %p208, %p209
      %p211 = scmp.ne.s32.totalorder %s203, %s205
      %p212 = scmp.eq.s32.totalorder %s29, 1
      %p213 = por %p211, %p212
      %p214 = scmp.ne.s32.totalorder %s205, %s206
      %p215 = scmp.eq.s32.totalorder %s29, 0
      %p216 = por %p214, %p215
      %p217 = scmp.ne.s32.totalorder %s205, %s206
      %p218 = scmp.eq.s32.totalorder %s30, 1
      %p219 = por %p217, %p218
      %p221 = scmp.ne.s32.totalorder %s206, %s220
      %p222 = scmp.eq.s32.totalorder %s30, 0
      %p223 = por %p221, %p222
      %s224 = ssub.s32 %s31, %s43
      %s225 = ssub.s32 %s32, %s39
      %s226 = sor.u32 %s224, %s225
      %p227 = scmp.eq.s32.totalorder %s226, 0
      %s229 = sadd.s32 %s228, 1
      %s230 = scalar_select %p227, %s228, %s229
      %p233 = pneg %p227
      %p234 = scmp.eq.s32.totalorder %s24, 1
      %p235 = por %p233, %p234
      %p236 = scmp.ne.s32.totalorder %s228, %s231
      %p237 = scmp.eq.s32.totalorder %s24, 0
      %p238 = por %p236, %p237
      %p239 = scmp.ne.s32.totalorder %s228, %s231
      %p240 = scmp.eq.s32.totalorder %s29, 1
      %p241 = por %p239, %p240
      %p242 = scmp.ne.s32.totalorder %s231, %s232
      %p243 = scmp.eq.s32.totalorder %s29, 0
      %p244 = por %p242, %p243
      %p245 = scmp.ne.s32.totalorder %s231, %s232
      %p246 = scmp.eq.s32.totalorder %s30, 1
      %p247 = por %p245, %p246
      %p249 = scmp.ne.s32.totalorder %s232, %s248
      %p250 = scmp.eq.s32.totalorder %s30, 0
      %p251 = por %p249, %p250
      %p252 = scmp.le.s32.totalorder 1, %s24
      %p253 = scmp.lt.s32.totalorder %s24, 3
      %p254 = pnand %p252, %p253
      %p255 = pneg %p254
      // Predicated region
      $region9: #{tpu_custom_call.1} parent=5 // pred_check
        _
      $region10: #{tpu_custom_call.1} parent=5 // pred_check_branch
        %257 = sbr.rel (%p254) target = $region12
      $region11: #{tpu_custom_call.1} parent=5 // pred_region
        %s258 = ssub.s32 %s24, 1
        // Predicated region
        $region13: #{tpu_custom_call.1} parent=11 // pred_check
          %p259 = pneg %p111
        $region14: #{tpu_custom_call.1} parent=11 // pred_check_branch
          %261 = sbr.rel (%p259) target = $region16
        $region15: #{tpu_custom_call.1} parent=11 // pred_region
          %s263 = ssub.s32 1024, 1024
          %264 = vsyncadd [#allocation8], %s263
          %s265 = sshll.u32 [#allocation9], 4
          %s266 = int_to_ptr.vmem [resolvable:$true] %s265
          %271 = dma.hbm_to_vmem [thread:$0]  %s2, 1024, %s266, [#allocation8], 64, 64, 4
        $region16: #{tpu_custom_call.1} parent=11 // pred_fallthru
          _
        // Predicated region
        $region17: #{tpu_custom_call.1} parent=11 // pred_check
          %p272 = pneg %p132
        $region18: #{tpu_custom_call.1} parent=11 // pred_check_branch
          %274 = sbr.rel (%p272) target = $region20
        $region19: #{tpu_custom_call.1} parent=11 // pred_region
          _
        $region20: #{tpu_custom_call.1} parent=11 // pred_fallthru
          _
        // Predicated region
        $region21: #{tpu_custom_call.1} parent=11 // pred_check
          %p275 = pneg %p153
        $region22: #{tpu_custom_call.1} parent=11 // pred_check_branch
          %277 = sbr.rel (%p275) target = $region24
        $region23: #{tpu_custom_call.1} parent=11 // pred_region
          %s279 = ssub.s32 2048, 2048
          %280 = vsyncadd [#allocation11], %s279
          %s281 = sshll.u32 [#allocation10], 4
          %s282 = int_to_ptr.vmem [resolvable:$true] %s281
          %287 = dma.hbm_to_vmem [thread:$0]  %s4, 2048, %s282, [#allocation11], 128, 128, 8
        $region24: #{tpu_custom_call.1} parent=11 // pred_fallthru
          _
        // Predicated region
        $region25: #{tpu_custom_call.1} parent=11 // pred_check
          %p288 = pneg %p174
        $region26: #{tpu_custom_call.1} parent=11 // pred_check_branch
          %290 = sbr.rel (%p288) target = $region28
        $region27: #{tpu_custom_call.1} parent=11 // pred_region
          _
        $region28: #{tpu_custom_call.1} parent=11 // pred_fallthru
          _
        // Predicated region
        $region29: #{tpu_custom_call.1} parent=11 // pred_check
          %p291 = pneg %p195
        $region30: #{tpu_custom_call.1} parent=11 // pred_check_branch
          %293 = sbr.rel (%p291) target = $region32
        $region31: #{tpu_custom_call.1} parent=11 // pred_region
          %s295 = ssub.s32 1024, 1024
          %296 = vsyncadd [#allocation11], %s295
          %s297 = sshll.u32 [#allocation12], 4
          %s298 = int_to_ptr.vmem [resolvable:$true] %s297
          %303 = dma.hbm_to_vmem [thread:$0]  %s6, 1024, %s298, [#allocation11], 64, 64, 4
        $region32: #{tpu_custom_call.1} parent=11 // pred_fallthru
          _
        // Predicated region
        $region33: #{tpu_custom_call.1} parent=11 // pred_check
          %p304 = pneg %p216
        $region34: #{tpu_custom_call.1} parent=11 // pred_check_branch
          %306 = sbr.rel (%p304) target = $region36
        $region35: #{tpu_custom_call.1} parent=11 // pred_region
          _
        $region36: #{tpu_custom_call.1} parent=11 // pred_fallthru
          _
      $region12: #{tpu_custom_call.1} parent=5 // pred_fallthru
        _
      %p307 = scmp.lt.s32.totalorder %s24, 2
      // Predicated region
      $region37: #{tpu_custom_call.1} parent=5 // pred_check
        %p308 = pneg %p307
      $region38: #{tpu_custom_call.1} parent=5 // pred_check_branch
        %310 = sbr.rel (%p308) target = $region40
      $region39: #{tpu_custom_call.1} parent=5 // pred_region
        // Predicated region
        $region41: #{tpu_custom_call.1} parent=39 // pred_check
          %p311 = pneg %p58
        $region42: #{tpu_custom_call.1} parent=39 // pred_check_branch
          %313 = sbr.rel (%p311) target = $region44
        $region43: #{tpu_custom_call.1} parent=39 // pred_region
          %s314 = sand.u32 %s48, 1
          %s315 = scalar_lea.sflag [#allocation5], %s314
          %s316 = sand.u32 %s48, 1
          %s317 = smul.addr %s316, 128
          %s318 = scalar_lea.vmem [#allocation4], %s317
          %s319 = smul.u32 32, %s32
          %s321 = ssub.s32 2048, 2048
          %322 = vsyncadd %s315, %s321
          %s323 = smul.addr %s31, 32
          %s324 = sadd.s32 %s319, %s323
          %s325 = smul.addr %s324, 64
          %s326 = scalar_lea.hbm %s0, %s325
          %s327 = sshll.u32 %s318, 4
          %s328 = int_to_ptr.vmem [resolvable:$true] %s327
          %333 = dma.hbm_to_vmem [thread:$0]  %s326, 2048, %s328, %s315, 64, 64, 4
        $region44: #{tpu_custom_call.1} parent=39 // pred_fallthru
          _
        // Predicated region
        $region45: #{tpu_custom_call.1} parent=39 // pred_check
          %p334 = pneg %p84
        $region46: #{tpu_custom_call.1} parent=39 // pred_check_branch
          %336 = sbr.rel (%p334) target = $region48
        $region47: #{tpu_custom_call.1} parent=39 // pred_region
          %s337 = sand.u32 %s24, 1
          %s338 = scalar_lea.sflag [#allocation8], %s337
          %s339 = sand.u32 %s74, 1
          %s340 = smul.addr %s339, 128
          %s341 = scalar_lea.vmem [#allocation7], %s340
          %s343 = ssub.s32 2048, 2048
          %344 = vsyncadd %s338, %s343
          %s345 = smul.addr %s31, 32
          %s346 = smul.addr %s345, 64
          %s347 = scalar_lea.hbm %s1, %s346
          %s348 = sshll.u32 %s341, 4
          %s349 = int_to_ptr.vmem [resolvable:$true] %s348
          %354 = dma.hbm_to_vmem [thread:$0]  %s347, 2048, %s349, %s338, 64, 64, 4
        $region48: #{tpu_custom_call.1} parent=39 // pred_fallthru
          _
      $region40: #{tpu_custom_call.1} parent=5 // pred_fallthru
        _
      %p355 = scmp.le.s32.totalorder 1, %s24
      %p356 = scmp.lt.s32.totalorder %s24, 3
      %p357 = pnand %p355, %p356
      %p358 = pneg %p357
      // Predicated region
      $region49: #{tpu_custom_call.1} parent=5 // pred_check
        _
      $region50: #{tpu_custom_call.1} parent=5 // pred_check_branch
        %360 = sbr.rel (%p357) target = $region52
      $region51: #{tpu_custom_call.1} parent=5 // pred_region
        %s361 = ssub.s32 %s24, 1
        %s362 = sand.u32 %s51, 1
        %s363 = scalar_lea.sflag [#allocation5], %s362
        %s364 = sand.u32 %s51, 1
        %s365 = smul.addr %s364, 128
        %s366 = scalar_lea.vmem [#allocation4], %s365
        // Predicated region
        $region53: #{tpu_custom_call.1} parent=51 // pred_check
          %p367 = pneg %p64
        $region54: #{tpu_custom_call.1} parent=51 // pred_check_branch
          %369 = sbr.rel (%p367) target = $region56
        $region55: #{tpu_custom_call.1} parent=51 // pred_region
          %370 = dma.done %s363, 2048
        $region56: #{tpu_custom_call.1} parent=51 // pred_fallthru
          _
        %s371 = sand.u32 %s29, 1
        %s372 = scalar_lea.sflag [#allocation8], %s371
        %s373 = sand.u32 %s77, 1
        %s374 = smul.addr %s373, 128
        %s375 = scalar_lea.vmem [#allocation7], %s374
        // Predicated region
        $region57: #{tpu_custom_call.1} parent=51 // pred_check
          %p376 = pneg %p90
        $region58: #{tpu_custom_call.1} parent=51 // pred_check_branch
          %378 = sbr.rel (%p376) target = $region60
        $region59: #{tpu_custom_call.1} parent=51 // pred_region
          %379 = dma.done %s372, 2048
        $region60: #{tpu_custom_call.1} parent=51 // pred_fallthru
          _
        // Predicated region
        $region61: #{tpu_custom_call.1} parent=51 // pred_check
          %p380 = pneg %p111
        $region62: #{tpu_custom_call.1} parent=51 // pred_check_branch
          %382 = sbr.rel (%p380) target = $region64
        $region63: #{tpu_custom_call.1} parent=51 // pred_region
          %383 = dma.done [#allocation8], 1024
        $region64: #{tpu_custom_call.1} parent=51 // pred_fallthru
          _
        // Predicated region
        $region65: #{tpu_custom_call.1} parent=51 // pred_check
          %p384 = pneg %p153
        $region66: #{tpu_custom_call.1} parent=51 // pred_check_branch
          %386 = sbr.rel (%p384) target = $region68
        $region67: #{tpu_custom_call.1} parent=51 // pred_region
          %387 = dma.done [#allocation11], 2048
        $region68: #{tpu_custom_call.1} parent=51 // pred_fallthru
          _
        // Predicated region
        $region69: #{tpu_custom_call.1} parent=51 // pred_check
          %p388 = pneg %p195
        $region70: #{tpu_custom_call.1} parent=51 // pred_check_branch
          %390 = sbr.rel (%p388) target = $region72
        $region71: #{tpu_custom_call.1} parent=51 // pred_region
          %391 = dma.done [#allocation11], 1024
        $region72: #{tpu_custom_call.1} parent=51 // pred_fallthru
          _
        %s392 = sand.u32 %s51, 1
        %s393 = scalar_lea.sflag [#allocation5], %s392
        %s394 = sand.u32 %s51, 1
        %s395 = smul.addr %s394, 128
        %s396 = scalar_lea.vmem [#allocation4], %s395
        %p397 = pneg %p64
        %p398 = pneg %p61
        %s399 = sand.u32 %s29, 1
        %s400 = scalar_lea.sflag [#allocation8], %s399
        %s401 = sand.u32 %s77, 1
        %s402 = smul.addr %s401, 128
        %s403 = scalar_lea.vmem [#allocation7], %s402
        %p404 = pneg %p90
        %p405 = pneg %p87
        %p406 = pneg %p111
        %p407 = pneg %p108
        %p408 = pneg %p132
        %p409 = pneg %p129
        %p410 = pneg %p153
        %p411 = pneg %p150
        %p412 = pneg %p174
        %p413 = pneg %p171
        %p414 = pneg %p195
        %p415 = pneg %p192
        %p416 = pneg %p216
        %p417 = pneg %p213
        %p418 = pneg %p244
        %p419 = pneg %p241
        %s420 = sand.u32 %s231, 1
        %s421 = scalar_lea.sflag [#allocation6], %s420
        %s422 = sand.u32 %s231, 1
        %s423 = smul.addr %s422, 256
        %s424 = scalar_lea.vmem [#allocation13], %s423
        %s425 = smul.u32 32, %s34
        %s426 = smul.u32 32, %s34
        %p428 = scmp.eq.s32.totalorder %s34, 0
        // Predicated region
        $region73: #{tpu_custom_call.1} parent=51 // pred_check
          %p429 = pneg %p428
        $region74: #{tpu_custom_call.1} parent=51 // pred_check_branch
          %431 = sbr.rel (%p429) target = $region76
        $region75: #{tpu_custom_call.1} parent=51 // pred_region
          %v432 = vld [vmem:[%s375] sm:$0xf]
          %v433 = vld [vmem:[%s375 + $0x4] sm:$0xf]
          %v434 = vld [vmem:[%s375 + $0x8] sm:$0xf]
          %v435 = vld [vmem:[%s375 + $0xc] sm:$0xf]
          %v436 = vld [vmem:[%s375 + $0x10] sm:$0xf]
          %v437 = vld [vmem:[%s375 + $0x14] sm:$0xf]
          %v438 = vld [vmem:[%s375 + $0x18] sm:$0xf]
          %v439 = vld [vmem:[%s375 + $0x1c] sm:$0xf]
          %v440 = vld [vmem:[%s375 + $0x20] sm:$0xf]
          %v441 = vld [vmem:[%s375 + $0x24] sm:$0xf]
          %v442 = vld [vmem:[%s375 + $0x28] sm:$0xf]
          %v443 = vld [vmem:[%s375 + $0x2c] sm:$0xf]
          %v444 = vld [vmem:[%s375 + $0x30] sm:$0xf]
          %v445 = vld [vmem:[%s375 + $0x34] sm:$0xf]
          %v446 = vld [vmem:[%s375 + $0x38] sm:$0xf]
          %v447 = vld [vmem:[%s375 + $0x3c] sm:$0xf]
          %v448 = vld [vmem:[%s375 + $0x40] sm:$0xf]
          %v449 = vld [vmem:[%s375 + $0x44] sm:$0xf]
          %v450 = vld [vmem:[%s375 + $0x48] sm:$0xf]
          %v451 = vld [vmem:[%s375 + $0x4c] sm:$0xf]
          %v452 = vld [vmem:[%s375 + $0x50] sm:$0xf]
          %v453 = vld [vmem:[%s375 + $0x54] sm:$0xf]
          %v454 = vld [vmem:[%s375 + $0x58] sm:$0xf]
          %v455 = vld [vmem:[%s375 + $0x5c] sm:$0xf]
          %v456 = vld [vmem:[%s375 + $0x60] sm:$0xf]
          %v457 = vld [vmem:[%s375 + $0x64] sm:$0xf]
          %v458 = vld [vmem:[%s375 + $0x68] sm:$0xf]
          %v459 = vld [vmem:[%s375 + $0x6c] sm:$0xf]
          %v460 = vld [vmem:[%s375 + $0x70] sm:$0xf]
          %v461 = vld [vmem:[%s375 + $0x74] sm:$0xf]
          %v462 = vld [vmem:[%s375 + $0x78] sm:$0xf]
          %v463 = vld [vmem:[%s375 + $0x7c] sm:$0xf]
          %v464 = vld [vmem:[#allocation10] sm:$0xff]
          %v465 = vld [vmem:[#allocation10 + $0x8] sm:$0xff]
          %v466 = vld [vmem:[#allocation10 + $0x10] sm:$0xff]
          %v467 = vld [vmem:[#allocation10 + $0x18] sm:$0xff]
          %v468 = vld [vmem:[#allocation10 + $0x20] sm:$0xff]
          %v469 = vld [vmem:[#allocation10 + $0x28] sm:$0xff]
          %v470 = vld [vmem:[#allocation10 + $0x30] sm:$0xff]
          %v471 = vld [vmem:[#allocation10 + $0x38] sm:$0xff]
          %v472 = vld [vmem:[#allocation10 + $0x40] sm:$0xff]
          %v473 = vld [vmem:[#allocation10 + $0x48] sm:$0xff]
          %v474 = vld [vmem:[#allocation10 + $0x50] sm:$0xff]
          %v475 = vld [vmem:[#allocation10 + $0x58] sm:$0xff]
          %v476 = vld [vmem:[#allocation10 + $0x60] sm:$0xff]
          %v477 = vld [vmem:[#allocation10 + $0x68] sm:$0xff]
          %v478 = vld [vmem:[#allocation10 + $0x70] sm:$0xff]
          %v479 = vld [vmem:[#allocation10 + $0x78] sm:$0xff]
          %v480 = vld [vmem:[%s5] sm:$0x3]
          %v482 = vlaneseq
          %v483 = vshrl.u32 %v482, 7
          %v484 = vsub.s32 0, %v483
          %v485 = vrot.slane %v480, %v484
          %v486 = vlaneseq
          %v487 = vshrl.u32 %v486, 7
          %v488 = vsub.s32 1, %v487
          %v489 = vrot.slane %v480, %v488
          %v524 = vunpack.c.l.b16 %v432
          %v525 = vunpack.c.l.b16 %v433
          %v526 = vunpack.c.l.b16 %v434
          %v527 = vunpack.c.l.b16 %v435
          %v528 = vunpack.c.l.b16 %v436
          %v529 = vunpack.c.l.b16 %v437
          %v530 = vunpack.c.l.b16 %v438
          %v531 = vunpack.c.l.b16 %v439
          %v532 = vunpack.c.l.b16 %v440
          %v533 = vunpack.c.l.b16 %v441
          %v534 = vunpack.c.l.b16 %v442
          %v535 = vunpack.c.l.b16 %v443
          %v536 = vunpack.c.l.b16 %v444
          %v537 = vunpack.c.l.b16 %v445
          %v538 = vunpack.c.l.b16 %v446
          %v539 = vunpack.c.l.b16 %v447
          %v540 = vunpack.c.l.b16 %v448
          %v541 = vunpack.c.l.b16 %v449
          %v542 = vunpack.c.l.b16 %v450
          %v543 = vunpack.c.l.b16 %v451
          %v544 = vunpack.c.l.b16 %v452
          %v545 = vunpack.c.l.b16 %v453
          %v546 = vunpack.c.l.b16 %v454
          %v547 = vunpack.c.l.b16 %v455
          %v548 = vunpack.c.l.b16 %v456
          %v549 = vunpack.c.l.b16 %v457
          %v550 = vunpack.c.l.b16 %v458
          %v551 = vunpack.c.l.b16 %v459
          %v552 = vunpack.c.l.b16 %v460
          %v553 = vunpack.c.l.b16 %v461
          %v554 = vunpack.c.l.b16 %v462
          %v555 = vunpack.c.l.b16 %v463
          %v556 = vpack.c.b16 %v525, %v524
          %v557 = vpack.c.b16 %v527, %v526
          %v558 = vpack.c.b16 %v529, %v528
          %v559 = vpack.c.b16 %v531, %v530
          %v560 = vpack.c.b16 %v533, %v532
          %v561 = vpack.c.b16 %v535, %v534
          %v562 = vpack.c.b16 %v537, %v536
          %v563 = vpack.c.b16 %v539, %v538
          %v564 = vpack.c.b16 %v541, %v540
          %v565 = vpack.c.b16 %v543, %v542
          %v566 = vpack.c.b16 %v545, %v544
          %v567 = vpack.c.b16 %v547, %v546
          %v568 = vpack.c.b16 %v549, %v548
          %v569 = vpack.c.b16 %v551, %v550
          %v570 = vpack.c.b16 %v553, %v552
          %v571 = vpack.c.b16 %v555, %v554
          %v604 = vunpack.c.l.b16 %v464
          %v605 = vunpack.c.h.b16 %v464
          %v606 = vunpack.c.l.b16 %v465
          %v607 = vunpack.c.h.b16 %v465
          %v608 = vunpack.c.l.b16 %v466
          %v609 = vunpack.c.h.b16 %v466
          %v610 = vunpack.c.l.b16 %v467
          %v611 = vunpack.c.h.b16 %v467
          %v612 = vunpack.c.l.b16 %v468
          %v613 = vunpack.c.h.b16 %v468
          %v614 = vunpack.c.l.b16 %v469
          %v615 = vunpack.c.h.b16 %v469
          %v616 = vunpack.c.l.b16 %v470
          %v617 = vunpack.c.h.b16 %v470
          %v618 = vunpack.c.l.b16 %v471
          %v619 = vunpack.c.h.b16 %v471
          %v620 = vunpack.c.l.b16 %v472
          %v621 = vunpack.c.h.b16 %v472
          %v622 = vunpack.c.l.b16 %v473
          %v623 = vunpack.c.h.b16 %v473
          %v624 = vunpack.c.l.b16 %v474
          %v625 = vunpack.c.h.b16 %v474
          %v626 = vunpack.c.l.b16 %v475
          %v627 = vunpack.c.h.b16 %v475
          %v628 = vunpack.c.l.b16 %v476
          %v629 = vunpack.c.h.b16 %v476
          %v630 = vunpack.c.l.b16 %v477
          %v631 = vunpack.c.h.b16 %v477
          %v632 = vunpack.c.l.b16 %v478
          %v633 = vunpack.c.h.b16 %v478
          %v634 = vunpack.c.l.b16 %v479
          %v635 = vunpack.c.h.b16 %v479
          %v636 = vpack.c.b16 %v606, %v604
          %v637 = vpack.c.b16 %v607, %v605
          %v638 = vpack.c.b16 %v610, %v608
          %v639 = vpack.c.b16 %v611, %v609
          %v640 = vpack.c.b16 %v614, %v612
          %v641 = vpack.c.b16 %v615, %v613
          %v642 = vpack.c.b16 %v618, %v616
          %v643 = vpack.c.b16 %v619, %v617
          %v644 = vpack.c.b16 %v622, %v620
          %v645 = vpack.c.b16 %v623, %v621
          %v646 = vpack.c.b16 %v626, %v624
          %v647 = vpack.c.b16 %v627, %v625
          %v648 = vpack.c.b16 %v630, %v628
          %v649 = vpack.c.b16 %v631, %v629
          %v650 = vpack.c.b16 %v634, %v632
          %v651 = vpack.c.b16 %v635, %v633
          %668 = vmatprep.subr.bf16.mxu0 %v651
          %669 = vmatpush1.bf16.msra.mxu0 %v650
          %670 = vmatprep.subr.bf16.mxu0 %v649
          %671 = vmatpush1.bf16.msra.mxu0 %v648
          %672 = vmatprep.subr.bf16.mxu0 %v647
          %673 = vmatpush1.bf16.msra.mxu0 %v646
          %674 = vmatprep.subr.bf16.mxu0 %v645
          %675 = vmatpush1.bf16.msra.mxu0 %v644
          %676 = vmatprep.subr.bf16.mxu0 %v643
          %677 = vmatpush1.bf16.msra.mxu0 %v642
          %678 = vmatprep.subr.bf16.mxu0 %v641
          %679 = vmatpush1.bf16.msra.mxu0 %v640
          %680 = vmatprep.subr.bf16.mxu0 %v639
          %681 = vmatpush1.bf16.msra.mxu0 %v638
          %682 = vmatprep.subr.bf16.mxu0 %v637
          %683 = vmatpush1.bf16.msra.mxu0 %v636
          %684 = vmatprep.subr.bf16.mxu0 0
          %685 = vmatpush2.bf16.msra.mxu0 0
          %686 = vmatprep.subr.bf16.mxu0 0
          %687 = vmatpush2.bf16.msra.mxu0 0
          %688 = vmatprep.subr.bf16.mxu0 0
          %689 = vmatpush2.bf16.msra.mxu0 0
          %690 = vmatprep.subr.bf16.mxu0 0
          %691 = vmatpush2.bf16.msra.mxu0 0
          %692 = vmatprep.subr.bf16.mxu0 0
          %693 = vmatpush2.bf16.msra.mxu0 0
          %694 = vmatprep.subr.bf16.mxu0 0
          %695 = vmatpush2.bf16.msra.mxu0 0
          %696 = vmatprep.subr.bf16.mxu0 0
          %697 = vmatpush2.bf16.msra.mxu0 0
          %698 = vmatprep.subr.bf16.mxu0 0
          %699 = vmatpush2.bf16.msra.mxu0 0
          %700 = vmatprep.mubr.bf16.mxu0 0
          %701 = vmatmul.mubr.bf16.gmra.mxu0 %v556
          %v702 = vpop.f32.mrf.mxu0
          %v703 = vadd.f32 %v485, %v702
          %v704 = vpop.f32.mrf.mxu0
          %v705 = vadd.f32 %v489, %v704
          %v706 = vpop.f32.mrf.mxu0
          %v707 = vadd.f32 %v485, %v706
          %v708 = vpop.f32.mrf.mxu0
          %v709 = vadd.f32 %v489, %v708
          %710 = vmatprep.mubr.bf16.mxu0 0
          %711 = vmatmul.mubr.bf16.gmra.mxu0 %v557
          %v712 = vpop.f32.mrf.mxu0
          %v713 = vadd.f32 %v485, %v712
          %v714 = vpop.f32.mrf.mxu0
          %v715 = vadd.f32 %v489, %v714
          %v716 = vpop.f32.mrf.mxu0
          %v717 = vadd.f32 %v485, %v716
          %v718 = vpop.f32.mrf.mxu0
          %v719 = vadd.f32 %v489, %v718
          %720 = vmatprep.mubr.bf16.mxu0 0
          %721 = vmatmul.mubr.bf16.gmra.mxu0 %v558
          %v722 = vpop.f32.mrf.mxu0
          %v723 = vadd.f32 %v485, %v722
          %v724 = vpop.f32.mrf.mxu0
          %v725 = vadd.f32 %v489, %v724
          %v726 = vpop.f32.mrf.mxu0
          %v727 = vadd.f32 %v485, %v726
          %v728 = vpop.f32.mrf.mxu0
          %v729 = vadd.f32 %v489, %v728
          %730 = vmatprep.mubr.bf16.mxu0 0
          %731 = vmatmul.mubr.bf16.gmra.mxu0 %v559
          %v732 = vpop.f32.mrf.mxu0
          %v733 = vadd.f32 %v485, %v732
          %v734 = vpop.f32.mrf.mxu0
          %v735 = vadd.f32 %v489, %v734
          %v736 = vpop.f32.mrf.mxu0
          %v737 = vadd.f32 %v485, %v736
          %v738 = vpop.f32.mrf.mxu0
          %v739 = vadd.f32 %v489, %v738
          %740 = vmatprep.mubr.bf16.mxu0 0
          %741 = vmatmul.mubr.bf16.gmra.mxu0 %v560
          %v742 = vpop.f32.mrf.mxu0
          %v743 = vadd.f32 %v485, %v742
          %v744 = vpop.f32.mrf.mxu0
          %v745 = vadd.f32 %v489, %v744
          %v746 = vpop.f32.mrf.mxu0
          %v747 = vadd.f32 %v485, %v746
          %v748 = vpop.f32.mrf.mxu0
          %v749 = vadd.f32 %v489, %v748
          %750 = vmatprep.mubr.bf16.mxu0 0
          %751 = vmatmul.mubr.bf16.gmra.mxu0 %v561
          %v752 = vpop.f32.mrf.mxu0
          %v753 = vadd.f32 %v485, %v752
          %v754 = vpop.f32.mrf.mxu0
          %v755 = vadd.f32 %v489, %v754
          %v756 = vpop.f32.mrf.mxu0
          %v757 = vadd.f32 %v485, %v756
          %v758 = vpop.f32.mrf.mxu0
          %v759 = vadd.f32 %v489, %v758
          %760 = vmatprep.mubr.bf16.mxu0 0
          %761 = vmatmul.mubr.bf16.gmra.mxu0 %v562
          %v762 = vpop.f32.mrf.mxu0
          %v763 = vadd.f32 %v485, %v762
          %v764 = vpop.f32.mrf.mxu0
          %v765 = vadd.f32 %v489, %v764
          %v766 = vpop.f32.mrf.mxu0
          %v767 = vadd.f32 %v485, %v766
          %v768 = vpop.f32.mrf.mxu0
          %v769 = vadd.f32 %v489, %v768
          %770 = vmatprep.mubr.bf16.mxu0 0
          %771 = vmatmul.mubr.bf16.gmra.mxu0 %v563
          %v772 = vpop.f32.mrf.mxu0
          %v773 = vadd.f32 %v485, %v772
          %v774 = vpop.f32.mrf.mxu0
          %v775 = vadd.f32 %v489, %v774
          %v776 = vpop.f32.mrf.mxu0
          %v777 = vadd.f32 %v485, %v776
          %v778 = vpop.f32.mrf.mxu0
          %v779 = vadd.f32 %v489, %v778
          %780 = vmatprep.mubr.bf16.mxu0 0
          %781 = vmatmul.mubr.bf16.gmra.mxu0 %v564
          %v782 = vpop.f32.mrf.mxu0
          %v783 = vadd.f32 %v485, %v782
          %v784 = vpop.f32.mrf.mxu0
          %v785 = vadd.f32 %v489, %v784
          %v786 = vpop.f32.mrf.mxu0
          %v787 = vadd.f32 %v485, %v786
          %v788 = vpop.f32.mrf.mxu0
          %v789 = vadd.f32 %v489, %v788
          %790 = vmatprep.mubr.bf16.mxu0 0
          %791 = vmatmul.mubr.bf16.gmra.mxu0 %v565
          %v792 = vpop.f32.mrf.mxu0
          %v793 = vadd.f32 %v485, %v792
          %v794 = vpop.f32.mrf.mxu0
          %v795 = vadd.f32 %v489, %v794
          %v796 = vpop.f32.mrf.mxu0
          %v797 = vadd.f32 %v485, %v796
          %v798 = vpop.f32.mrf.mxu0
          %v799 = vadd.f32 %v489, %v798
          %800 = vmatprep.mubr.bf16.mxu0 0
          %801 = vmatmul.mubr.bf16.gmra.mxu0 %v566
          %v802 = vpop.f32.mrf.mxu0
          %v803 = vadd.f32 %v485, %v802
          %v804 = vpop.f32.mrf.mxu0
          %v805 = vadd.f32 %v489, %v804
          %v806 = vpop.f32.mrf.mxu0
          %v807 = vadd.f32 %v485, %v806
          %v808 = vpop.f32.mrf.mxu0
          %v809 = vadd.f32 %v489, %v808
          %810 = vmatprep.mubr.bf16.mxu0 0
          %811 = vmatmul.mubr.bf16.gmra.mxu0 %v567
          %v812 = vpop.f32.mrf.mxu0
          %v813 = vadd.f32 %v485, %v812
          %v814 = vpop.f32.mrf.mxu0
          %v815 = vadd.f32 %v489, %v814
          %v816 = vpop.f32.mrf.mxu0
          %v817 = vadd.f32 %v485, %v816
          %v818 = vpop.f32.mrf.mxu0
          %v819 = vadd.f32 %v489, %v818
          %820 = vmatprep.mubr.bf16.mxu0 0
          %821 = vmatmul.mubr.bf16.gmra.mxu0 %v568
          %v822 = vpop.f32.mrf.mxu0
          %v823 = vadd.f32 %v485, %v822
          %v824 = vpop.f32.mrf.mxu0
          %v825 = vadd.f32 %v489, %v824
          %v826 = vpop.f32.mrf.mxu0
          %v827 = vadd.f32 %v485, %v826
          %v828 = vpop.f32.mrf.mxu0
          %v829 = vadd.f32 %v489, %v828
          %830 = vmatprep.mubr.bf16.mxu0 0
          %831 = vmatmul.mubr.bf16.gmra.mxu0 %v569
          %v832 = vpop.f32.mrf.mxu0
          %v833 = vadd.f32 %v485, %v832
          %v834 = vpop.f32.mrf.mxu0
          %v835 = vadd.f32 %v489, %v834
          %v836 = vpop.f32.mrf.mxu0
          %v837 = vadd.f32 %v485, %v836
          %v838 = vpop.f32.mrf.mxu0
          %v839 = vadd.f32 %v489, %v838
          %840 = vmatprep.mubr.bf16.mxu0 0
          %841 = vmatmul.mubr.bf16.gmra.mxu0 %v570
          %v842 = vpop.f32.mrf.mxu0
          %v843 = vadd.f32 %v485, %v842
          %v844 = vpop.f32.mrf.mxu0
          %v845 = vadd.f32 %v489, %v844
          %v846 = vpop.f32.mrf.mxu0
          %v847 = vadd.f32 %v485, %v846
          %v848 = vpop.f32.mrf.mxu0
          %v849 = vadd.f32 %v489, %v848
          %850 = vmatprep.mubr.bf16.mxu0 0
          %851 = vmatmul.mubr.bf16.gmra.mxu0 %v571
          %v852 = vpop.f32.mrf.mxu0
          %v853 = vadd.f32 %v485, %v852
          %v854 = vpop.f32.mrf.mxu0
          %v855 = vadd.f32 %v489, %v854
          %v856 = vpop.f32.mrf.mxu0
          %v857 = vadd.f32 %v485, %v856
          %v858 = vpop.f32.mrf.mxu0
          %v859 = vadd.f32 %v489, %v858
          %860 = vdwg.mxu0
          %v861 = vpack.c.bf16 %v707, %v703
          %v862 = vpack.c.bf16 %v717, %v713
          %v863 = vpack.c.bf16 %v727, %v723
          %v864 = vpack.c.bf16 %v737, %v733
          %v865 = vpack.c.bf16 %v747, %v743
          %v866 = vpack.c.bf16 %v757, %v753
          %v867 = vpack.c.bf16 %v767, %v763
          %v868 = vpack.c.bf16 %v777, %v773
          %v869 = vpack.c.bf16 %v787, %v783
          %v870 = vpack.c.bf16 %v797, %v793
          %v871 = vpack.c.bf16 %v807, %v803
          %v872 = vpack.c.bf16 %v817, %v813
          %v873 = vpack.c.bf16 %v827, %v823
          %v874 = vpack.c.bf16 %v837, %v833
          %v875 = vpack.c.bf16 %v847, %v843
          %v876 = vpack.c.bf16 %v857, %v853
          %v893 = vunpack.c.l.b16 %v861
          %v894 = vunpack.c.h.b16 %v861
          %v895 = vunpack.c.l.b16 %v862
          %v896 = vunpack.c.h.b16 %v862
          %v897 = vunpack.c.l.b16 %v863
          %v898 = vunpack.c.h.b16 %v863
          %v899 = vunpack.c.l.b16 %v864
          %v900 = vunpack.c.h.b16 %v864
          %v901 = vunpack.c.l.b16 %v865
          %v902 = vunpack.c.h.b16 %v865
          %v903 = vunpack.c.l.b16 %v866
          %v904 = vunpack.c.h.b16 %v866
          %v905 = vunpack.c.l.b16 %v867
          %v906 = vunpack.c.h.b16 %v867
          %v907 = vunpack.c.l.b16 %v868
          %v908 = vunpack.c.h.b16 %v868
          %v909 = vunpack.c.l.b16 %v869
          %v910 = vunpack.c.h.b16 %v869
          %v911 = vunpack.c.l.b16 %v870
          %v912 = vunpack.c.h.b16 %v870
          %v913 = vunpack.c.l.b16 %v871
          %v914 = vunpack.c.h.b16 %v871
          %v915 = vunpack.c.l.b16 %v872
          %v916 = vunpack.c.h.b16 %v872
          %v917 = vunpack.c.l.b16 %v873
          %v918 = vunpack.c.h.b16 %v873
          %v919 = vunpack.c.l.b16 %v874
          %v920 = vunpack.c.h.b16 %v874
          %v921 = vunpack.c.l.b16 %v875
          %v922 = vunpack.c.h.b16 %v875
          %v923 = vunpack.c.l.b16 %v876
          %v924 = vunpack.c.h.b16 %v876
          %v925 = vpack.c.b16 %v893, %v893
          %v926 = vpack.c.b16 %v894, %v894
          %v927 = vpack.c.b16 %v895, %v895
          %v928 = vpack.c.b16 %v896, %v896
          %v929 = vpack.c.b16 %v897, %v897
          %v930 = vpack.c.b16 %v898, %v898
          %v931 = vpack.c.b16 %v899, %v899
          %v932 = vpack.c.b16 %v900, %v900
          %v933 = vpack.c.b16 %v901, %v901
          %v934 = vpack.c.b16 %v902, %v902
          %v935 = vpack.c.b16 %v903, %v903
          %v936 = vpack.c.b16 %v904, %v904
          %v937 = vpack.c.b16 %v905, %v905
          %v938 = vpack.c.b16 %v906, %v906
          %v939 = vpack.c.b16 %v907, %v907
          %v940 = vpack.c.b16 %v908, %v908
          %v941 = vpack.c.b16 %v909, %v909
          %v942 = vpack.c.b16 %v910, %v910
          %v943 = vpack.c.b16 %v911, %v911
          %v944 = vpack.c.b16 %v912, %v912
          %v945 = vpack.c.b16 %v913, %v913
          %v946 = vpack.c.b16 %v914, %v914
          %v947 = vpack.c.b16 %v915, %v915
          %v948 = vpack.c.b16 %v916, %v916
          %v949 = vpack.c.b16 %v917, %v917
          %v950 = vpack.c.b16 %v918, %v918
          %v951 = vpack.c.b16 %v919, %v919
          %v952 = vpack.c.b16 %v920, %v920
          %v953 = vpack.c.b16 %v921, %v921
          %v954 = vpack.c.b16 %v922, %v922
          %v955 = vpack.c.b16 %v923, %v923
          %v956 = vpack.c.b16 %v924, %v924
          %989 = vst [vmem:[#allocation2] sm:$0xf] %v925
          %990 = vst [vmem:[#allocation2 + $0x4] sm:$0xf] %v926
          %991 = vst [vmem:[#allocation2 + $0x8] sm:$0xf] %v927
          %992 = vst [vmem:[#allocation2 + $0xc] sm:$0xf] %v928
          %993 = vst [vmem:[#allocation2 + $0x10] sm:$0xf] %v929
          %994 = vst [vmem:[#allocation2 + $0x14] sm:$0xf] %v930
          %995 = vst [vmem:[#allocation2 + $0x18] sm:$0xf] %v931
          %996 = vst [vmem:[#allocation2 + $0x1c] sm:$0xf] %v932
          %997 = vst [vmem:[#allocation2 + $0x20] sm:$0xf] %v933
          %998 = vst [vmem:[#allocation2 + $0x24] sm:$0xf] %v934
          %999 = vst [vmem:[#allocation2 + $0x28] sm:$0xf] %v935
          %1000 = vst [vmem:[#allocation2 + $0x2c] sm:$0xf] %v936
          %1001 = vst [vmem:[#allocation2 + $0x30] sm:$0xf] %v937
          %1002 = vst [vmem:[#allocation2 + $0x34] sm:$0xf] %v938
          %1003 = vst [vmem:[#allocation2 + $0x38] sm:$0xf] %v939
          %1004 = vst [vmem:[#allocation2 + $0x3c] sm:$0xf] %v940
          %1005 = vst [vmem:[#allocation2 + $0x40] sm:$0xf] %v941
          %1006 = vst [vmem:[#allocation2 + $0x44] sm:$0xf] %v942
          %1007 = vst [vmem:[#allocation2 + $0x48] sm:$0xf] %v943
          %1008 = vst [vmem:[#allocation2 + $0x4c] sm:$0xf] %v944
          %1009 = vst [vmem:[#allocation2 + $0x50] sm:$0xf] %v945
          %1010 = vst [vmem:[#allocation2 + $0x54] sm:$0xf] %v946
          %1011 = vst [vmem:[#allocation2 + $0x58] sm:$0xf] %v947
          %1012 = vst [vmem:[#allocation2 + $0x5c] sm:$0xf] %v948
          %1013 = vst [vmem:[#allocation2 + $0x60] sm:$0xf] %v949
          %1014 = vst [vmem:[#allocation2 + $0x64] sm:$0xf] %v950
          %1015 = vst [vmem:[#allocation2 + $0x68] sm:$0xf] %v951
          %1016 = vst [vmem:[#allocation2 + $0x6c] sm:$0xf] %v952
          %1017 = vst [vmem:[#allocation2 + $0x70] sm:$0xf] %v953
          %1018 = vst [vmem:[#allocation2 + $0x74] sm:$0xf] %v954
          %1019 = vst [vmem:[#allocation2 + $0x78] sm:$0xf] %v955
          %1020 = vst [vmem:[#allocation2 + $0x7c] sm:$0xf] %v956
          %v1021 = vpack.c.bf16 %v709, %v705
          %v1022 = vpack.c.bf16 %v719, %v715
          %v1023 = vpack.c.bf16 %v729, %v725
          %v1024 = vpack.c.bf16 %v739, %v735
          %v1025 = vpack.c.bf16 %v749, %v745
          %v1026 = vpack.c.bf16 %v759, %v755
          %v1027 = vpack.c.bf16 %v769, %v765
          %v1028 = vpack.c.bf16 %v779, %v775
          %v1029 = vpack.c.bf16 %v789, %v785
          %v1030 = vpack.c.bf16 %v799, %v795
          %v1031 = vpack.c.bf16 %v809, %v805
          %v1032 = vpack.c.bf16 %v819, %v815
          %v1033 = vpack.c.bf16 %v829, %v825
          %v1034 = vpack.c.bf16 %v839, %v835
          %v1035 = vpack.c.bf16 %v849, %v845
          %v1036 = vpack.c.bf16 %v859, %v855
          %v1053 = vunpack.c.l.b16 %v1021
          %v1054 = vunpack.c.h.b16 %v1021
          %v1055 = vunpack.c.l.b16 %v1022
          %v1056 = vunpack.c.h.b16 %v1022
          %v1057 = vunpack.c.l.b16 %v1023
          %v1058 = vunpack.c.h.b16 %v1023
          %v1059 = vunpack.c.l.b16 %v1024
          %v1060 = vunpack.c.h.b16 %v1024
          %v1061 = vunpack.c.l.b16 %v1025
          %v1062 = vunpack.c.h.b16 %v1025
          %v1063 = vunpack.c.l.b16 %v1026
          %v1064 = vunpack.c.h.b16 %v1026
          %v1065 = vunpack.c.l.b16 %v1027
          %v1066 = vunpack.c.h.b16 %v1027
          %v1067 = vunpack.c.l.b16 %v1028
          %v1068 = vunpack.c.h.b16 %v1028
          %v1069 = vunpack.c.l.b16 %v1029
          %v1070 = vunpack.c.h.b16 %v1029
          %v1071 = vunpack.c.l.b16 %v1030
          %v1072 = vunpack.c.h.b16 %v1030
          %v1073 = vunpack.c.l.b16 %v1031
          %v1074 = vunpack.c.h.b16 %v1031
          %v1075 = vunpack.c.l.b16 %v1032
          %v1076 = vunpack.c.h.b16 %v1032
          %v1077 = vunpack.c.l.b16 %v1033
          %v1078 = vunpack.c.h.b16 %v1033
          %v1079 = vunpack.c.l.b16 %v1034
          %v1080 = vunpack.c.h.b16 %v1034
          %v1081 = vunpack.c.l.b16 %v1035
          %v1082 = vunpack.c.h.b16 %v1035
          %v1083 = vunpack.c.l.b16 %v1036
          %v1084 = vunpack.c.h.b16 %v1036
          %v1085 = vpack.c.b16 %v1053, %v1053
          %v1086 = vpack.c.b16 %v1054, %v1054
          %v1087 = vpack.c.b16 %v1055, %v1055
          %v1088 = vpack.c.b16 %v1056, %v1056
          %v1089 = vpack.c.b16 %v1057, %v1057
          %v1090 = vpack.c.b16 %v1058, %v1058
          %v1091 = vpack.c.b16 %v1059, %v1059
          %v1092 = vpack.c.b16 %v1060, %v1060
          %v1093 = vpack.c.b16 %v1061, %v1061
          %v1094 = vpack.c.b16 %v1062, %v1062
          %v1095 = vpack.c.b16 %v1063, %v1063
          %v1096 = vpack.c.b16 %v1064, %v1064
          %v1097 = vpack.c.b16 %v1065, %v1065
          %v1098 = vpack.c.b16 %v1066, %v1066
          %v1099 = vpack.c.b16 %v1067, %v1067
          %v1100 = vpack.c.b16 %v1068, %v1068
          %v1101 = vpack.c.b16 %v1069, %v1069
          %v1102 = vpack.c.b16 %v1070, %v1070
          %v1103 = vpack.c.b16 %v1071, %v1071
          %v1104 = vpack.c.b16 %v1072, %v1072
          %v1105 = vpack.c.b16 %v1073, %v1073
          %v1106 = vpack.c.b16 %v1074, %v1074
          %v1107 = vpack.c.b16 %v1075, %v1075
          %v1108 = vpack.c.b16 %v1076, %v1076
          %v1109 = vpack.c.b16 %v1077, %v1077
          %v1110 = vpack.c.b16 %v1078, %v1078
          %v1111 = vpack.c.b16 %v1079, %v1079
          %v1112 = vpack.c.b16 %v1080, %v1080
          %v1113 = vpack.c.b16 %v1081, %v1081
          %v1114 = vpack.c.b16 %v1082, %v1082
          %v1115 = vpack.c.b16 %v1083, %v1083
          %v1116 = vpack.c.b16 %v1084, %v1084
          %1149 = vst [vmem:[#allocation3] sm:$0xf] %v1085
          %1150 = vst [vmem:[#allocation3 + $0x4] sm:$0xf] %v1086
          %1151 = vst [vmem:[#allocation3 + $0x8] sm:$0xf] %v1087
          %1152 = vst [vmem:[#allocation3 + $0xc] sm:$0xf] %v1088
          %1153 = vst [vmem:[#allocation3 + $0x10] sm:$0xf] %v1089
          %1154 = vst [vmem:[#allocation3 + $0x14] sm:$0xf] %v1090
          %1155 = vst [vmem:[#allocation3 + $0x18] sm:$0xf] %v1091
          %1156 = vst [vmem:[#allocation3 + $0x1c] sm:$0xf] %v1092
          %1157 = vst [vmem:[#allocation3 + $0x20] sm:$0xf] %v1093
          %1158 = vst [vmem:[#allocation3 + $0x24] sm:$0xf] %v1094
          %1159 = vst [vmem:[#allocation3 + $0x28] sm:$0xf] %v1095
          %1160 = vst [vmem:[#allocation3 + $0x2c] sm:$0xf] %v1096
          %1161 = vst [vmem:[#allocation3 + $0x30] sm:$0xf] %v1097
          %1162 = vst [vmem:[#allocation3 + $0x34] sm:$0xf] %v1098
          %1163 = vst [vmem:[#allocation3 + $0x38] sm:$0xf] %v1099
          %1164 = vst [vmem:[#allocation3 + $0x3c] sm:$0xf] %v1100
          %1165 = vst [vmem:[#allocation3 + $0x40] sm:$0xf] %v1101
          %1166 = vst [vmem:[#allocation3 + $0x44] sm:$0xf] %v1102
          %1167 = vst [vmem:[#allocation3 + $0x48] sm:$0xf] %v1103
          %1168 = vst [vmem:[#allocation3 + $0x4c] sm:$0xf] %v1104
          %1169 = vst [vmem:[#allocation3 + $0x50] sm:$0xf] %v1105
          %1170 = vst [vmem:[#allocation3 + $0x54] sm:$0xf] %v1106
          %1171 = vst [vmem:[#allocation3 + $0x58] sm:$0xf] %v1107
          %1172 = vst [vmem:[#allocation3 + $0x5c] sm:$0xf] %v1108
          %1173 = vst [vmem:[#allocation3 + $0x60] sm:$0xf] %v1109
          %1174 = vst [vmem:[#allocation3 + $0x64] sm:$0xf] %v1110
          %1175 = vst [vmem:[#allocation3 + $0x68] sm:$0xf] %v1111
          %1176 = vst [vmem:[#allocation3 + $0x6c] sm:$0xf] %v1112
          %1177 = vst [vmem:[#allocation3 + $0x70] sm:$0xf] %v1113
          %1178 = vst [vmem:[#allocation3 + $0x74] sm:$0xf] %v1114
          %1179 = vst [vmem:[#allocation3 + $0x78] sm:$0xf] %v1115
          %1180 = vst [vmem:[#allocation3 + $0x7c] sm:$0xf] %v1116
        $region76: #{tpu_custom_call.1} parent=51 // pred_fallthru
          _
        %v1181 = vld [vmem:[%s366] sm:$0xf]
        %v1182 = vld [vmem:[%s366 + $0x4] sm:$0xf]
        %v1183 = vld [vmem:[%s366 + $0x8] sm:$0xf]
        %v1184 = vld [vmem:[%s366 + $0xc] sm:$0xf]
        %v1185 = vld [vmem:[%s366 + $0x10] sm:$0xf]
        %v1186 = vld [vmem:[%s366 + $0x14] sm:$0xf]
        %v1187 = vld [vmem:[%s366 + $0x18] sm:$0xf]
        %v1188 = vld [vmem:[%s366 + $0x1c] sm:$0xf]
        %v1189 = vld [vmem:[%s366 + $0x20] sm:$0xf]
        %v1190 = vld [vmem:[%s366 + $0x24] sm:$0xf]
        %v1191 = vld [vmem:[%s366 + $0x28] sm:$0xf]
        %v1192 = vld [vmem:[%s366 + $0x2c] sm:$0xf]
        %v1193 = vld [vmem:[%s366 + $0x30] sm:$0xf]
        %v1194 = vld [vmem:[%s366 + $0x34] sm:$0xf]
        %v1195 = vld [vmem:[%s366 + $0x38] sm:$0xf]
        %v1196 = vld [vmem:[%s366 + $0x3c] sm:$0xf]
        %v1197 = vld [vmem:[%s366 + $0x40] sm:$0xf]
        %v1198 = vld [vmem:[%s366 + $0x44] sm:$0xf]
        %v1199 = vld [vmem:[%s366 + $0x48] sm:$0xf]
        %v1200 = vld [vmem:[%s366 + $0x4c] sm:$0xf]
        %v1201 = vld [vmem:[%s366 + $0x50] sm:$0xf]
        %v1202 = vld [vmem:[%s366 + $0x54] sm:$0xf]
        %v1203 = vld [vmem:[%s366 + $0x58] sm:$0xf]
        %v1204 = vld [vmem:[%s366 + $0x5c] sm:$0xf]
        %v1205 = vld [vmem:[%s366 + $0x60] sm:$0xf]
        %v1206 = vld [vmem:[%s366 + $0x64] sm:$0xf]
        %v1207 = vld [vmem:[%s366 + $0x68] sm:$0xf]
        %v1208 = vld [vmem:[%s366 + $0x6c] sm:$0xf]
        %v1209 = vld [vmem:[%s366 + $0x70] sm:$0xf]
        %v1210 = vld [vmem:[%s366 + $0x74] sm:$0xf]
        %v1211 = vld [vmem:[%s366 + $0x78] sm:$0xf]
        %v1212 = vld [vmem:[%s366 + $0x7c] sm:$0xf]
        %v1213 = vld [vmem:[#allocation9] sm:$0xf]
        %v1214 = vld [vmem:[#allocation9 + $0x4] sm:$0xf]
        %v1215 = vld [vmem:[#allocation9 + $0x8] sm:$0xf]
        %v1216 = vld [vmem:[#allocation9 + $0xc] sm:$0xf]
        %v1217 = vld [vmem:[#allocation9 + $0x10] sm:$0xf]
        %v1218 = vld [vmem:[#allocation9 + $0x14] sm:$0xf]
        %v1219 = vld [vmem:[#allocation9 + $0x18] sm:$0xf]
        %v1220 = vld [vmem:[#allocation9 + $0x1c] sm:$0xf]
        %v1221 = vld [vmem:[#allocation9 + $0x20] sm:$0xf]
        %v1222 = vld [vmem:[#allocation9 + $0x24] sm:$0xf]
        %v1223 = vld [vmem:[#allocation9 + $0x28] sm:$0xf]
        %v1224 = vld [vmem:[#allocation9 + $0x2c] sm:$0xf]
        %v1225 = vld [vmem:[#allocation9 + $0x30] sm:$0xf]
        %v1226 = vld [vmem:[#allocation9 + $0x34] sm:$0xf]
        %v1227 = vld [vmem:[#allocation9 + $0x38] sm:$0xf]
        %v1228 = vld [vmem:[#allocation9 + $0x3c] sm:$0xf]
        %v1229 = vld [vmem:[%s3] sm:$0x1]
        %v1231 = vlaneseq
        %v1232 = vshrl.u32 %v1231, 7
        %v1233 = vsub.s32 0, %v1232
        %v1234 = vrot.slane %v1229, %v1233
        %v1268 = vunpack.c.l.b16 %v1181
        %v1269 = vunpack.c.l.b16 %v1182
        %v1270 = vunpack.c.l.b16 %v1183
        %v1271 = vunpack.c.l.b16 %v1184
        %v1272 = vunpack.c.l.b16 %v1185
        %v1273 = vunpack.c.l.b16 %v1186
        %v1274 = vunpack.c.l.b16 %v1187
        %v1275 = vunpack.c.l.b16 %v1188
        %v1276 = vunpack.c.l.b16 %v1189
        %v1277 = vunpack.c.l.b16 %v1190
        %v1278 = vunpack.c.l.b16 %v1191
        %v1279 = vunpack.c.l.b16 %v1192
        %v1280 = vunpack.c.l.b16 %v1193
        %v1281 = vunpack.c.l.b16 %v1194
        %v1282 = vunpack.c.l.b16 %v1195
        %v1283 = vunpack.c.l.b16 %v1196
        %v1284 = vunpack.c.l.b16 %v1197
        %v1285 = vunpack.c.l.b16 %v1198
        %v1286 = vunpack.c.l.b16 %v1199
        %v1287 = vunpack.c.l.b16 %v1200
        %v1288 = vunpack.c.l.b16 %v1201
        %v1289 = vunpack.c.l.b16 %v1202
        %v1290 = vunpack.c.l.b16 %v1203
        %v1291 = vunpack.c.l.b16 %v1204
        %v1292 = vunpack.c.l.b16 %v1205
        %v1293 = vunpack.c.l.b16 %v1206
        %v1294 = vunpack.c.l.b16 %v1207
        %v1295 = vunpack.c.l.b16 %v1208
        %v1296 = vunpack.c.l.b16 %v1209
        %v1297 = vunpack.c.l.b16 %v1210
        %v1298 = vunpack.c.l.b16 %v1211
        %v1299 = vunpack.c.l.b16 %v1212
        %v1300 = vpack.c.b16 %v1269, %v1268
        %v1301 = vpack.c.b16 %v1271, %v1270
        %v1302 = vpack.c.b16 %v1273, %v1272
        %v1303 = vpack.c.b16 %v1275, %v1274
        %v1304 = vpack.c.b16 %v1277, %v1276
        %v1305 = vpack.c.b16 %v1279, %v1278
        %v1306 = vpack.c.b16 %v1281, %v1280
        %v1307 = vpack.c.b16 %v1283, %v1282
        %v1308 = vpack.c.b16 %v1285, %v1284
        %v1309 = vpack.c.b16 %v1287, %v1286
        %v1310 = vpack.c.b16 %v1289, %v1288
        %v1311 = vpack.c.b16 %v1291, %v1290
        %v1312 = vpack.c.b16 %v1293, %v1292
        %v1313 = vpack.c.b16 %v1295, %v1294
        %v1314 = vpack.c.b16 %v1297, %v1296
        %v1315 = vpack.c.b16 %v1299, %v1298
        %v1348 = vunpack.c.l.b16 %v1213
        %v1349 = vunpack.c.l.b16 %v1214
        %v1350 = vunpack.c.l.b16 %v1215
        %v1351 = vunpack.c.l.b16 %v1216
        %v1352 = vunpack.c.l.b16 %v1217
        %v1353 = vunpack.c.l.b16 %v1218
        %v1354 = vunpack.c.l.b16 %v1219
        %v1355 = vunpack.c.l.b16 %v1220
        %v1356 = vunpack.c.l.b16 %v1221
        %v1357 = vunpack.c.l.b16 %v1222
        %v1358 = vunpack.c.l.b16 %v1223
        %v1359 = vunpack.c.l.b16 %v1224
        %v1360 = vunpack.c.l.b16 %v1225
        %v1361 = vunpack.c.l.b16 %v1226
        %v1362 = vunpack.c.l.b16 %v1227
        %v1363 = vunpack.c.l.b16 %v1228
        %v1364 = vpack.c.b16 %v1349, %v1348
        %v1365 = vpack.c.b16 %v1351, %v1350
        %v1366 = vpack.c.b16 %v1353, %v1352
        %v1367 = vpack.c.b16 %v1355, %v1354
        %v1368 = vpack.c.b16 %v1357, %v1356
        %v1369 = vpack.c.b16 %v1359, %v1358
        %v1370 = vpack.c.b16 %v1361, %v1360
        %v1371 = vpack.c.b16 %v1363, %v1362
        %1380 = vmatprep.subr.bf16.mxu0 0
        %1381 = vmatpush1.bf16.msra.mxu0 %v1371
        %1382 = vmatprep.subr.bf16.mxu0 0
        %1383 = vmatpush1.bf16.msra.mxu0 %v1370
        %1384 = vmatprep.subr.bf16.mxu0 0
        %1385 = vmatpush1.bf16.msra.mxu0 %v1369
        %1386 = vmatprep.subr.bf16.mxu0 0
        %1387 = vmatpush1.bf16.msra.mxu0 %v1368
        %1388 = vmatprep.subr.bf16.mxu0 0
        %1389 = vmatpush1.bf16.msra.mxu0 %v1367
        %1390 = vmatprep.subr.bf16.mxu0 0
        %1391 = vmatpush1.bf16.msra.mxu0 %v1366
        %1392 = vmatprep.subr.bf16.mxu0 0
        %1393 = vmatpush1.bf16.msra.mxu0 %v1365
        %1394 = vmatprep.subr.bf16.mxu0 0
        %1395 = vmatpush1.bf16.msra.mxu0 %v1364
        %1396 = vmatprep.subr.bf16.mxu0 0
        %1397 = vmatpush2.bf16.msra.mxu0 0
        %1398 = vmatprep.subr.bf16.mxu0 0
        %1399 = vmatpush2.bf16.msra.mxu0 0
        %1400 = vmatprep.subr.bf16.mxu0 0
        %1401 = vmatpush2.bf16.msra.mxu0 0
        %1402 = vmatprep.subr.bf16.mxu0 0
        %1403 = vmatpush2.bf16.msra.mxu0 0
        %1404 = vmatprep.subr.bf16.mxu0 0
        %1405 = vmatpush2.bf16.msra.mxu0 0
        %1406 = vmatprep.subr.bf16.mxu0 0
        %1407 = vmatpush2.bf16.msra.mxu0 0
        %1408 = vmatprep.subr.bf16.mxu0 0
        %1409 = vmatpush2.bf16.msra.mxu0 0
        %1410 = vmatprep.subr.bf16.mxu0 0
        %1411 = vmatpush2.bf16.msra.mxu0 0
        %1412 = vmatprep.mubr.bf16.mxu0 0
        %1413 = vmatmul.mubr.bf16.gmra.mxu0 %v1300
        %v1414 = vpop.f32.mrf.mxu0
        %v1415 = vadd.f32 %v1234, %v1414
        %v1416 = vpop.f32.mrf.mxu0
        %v1417 = vpop.f32.mrf.mxu0
        %v1418 = vadd.f32 %v1234, %v1417
        %v1419 = vpop.f32.mrf.mxu0
        %1420 = vmatprep.mubr.bf16.mxu0 0
        %1421 = vmatmul.mubr.bf16.gmra.mxu0 %v1301
        %v1422 = vpop.f32.mrf.mxu0
        %v1423 = vadd.f32 %v1234, %v1422
        %v1424 = vpop.f32.mrf.mxu0
        %v1425 = vpop.f32.mrf.mxu0
        %v1426 = vadd.f32 %v1234, %v1425
        %v1427 = vpop.f32.mrf.mxu0
        %1428 = vmatprep.mubr.bf16.mxu0 0
        %1429 = vmatmul.mubr.bf16.gmra.mxu0 %v1302
        %v1430 = vpop.f32.mrf.mxu0
        %v1431 = vadd.f32 %v1234, %v1430
        %v1432 = vpop.f32.mrf.mxu0
        %v1433 = vpop.f32.mrf.mxu0
        %v1434 = vadd.f32 %v1234, %v1433
        %v1435 = vpop.f32.mrf.mxu0
        %1436 = vmatprep.mubr.bf16.mxu0 0
        %1437 = vmatmul.mubr.bf16.gmra.mxu0 %v1303
        %v1438 = vpop.f32.mrf.mxu0
        %v1439 = vadd.f32 %v1234, %v1438
        %v1440 = vpop.f32.mrf.mxu0
        %v1441 = vpop.f32.mrf.mxu0
        %v1442 = vadd.f32 %v1234, %v1441
        %v1443 = vpop.f32.mrf.mxu0
        %1444 = vmatprep.mubr.bf16.mxu0 0
        %1445 = vmatmul.mubr.bf16.gmra.mxu0 %v1304
        %v1446 = vpop.f32.mrf.mxu0
        %v1447 = vadd.f32 %v1234, %v1446
        %v1448 = vpop.f32.mrf.mxu0
        %v1449 = vpop.f32.mrf.mxu0
        %v1450 = vadd.f32 %v1234, %v1449
        %v1451 = vpop.f32.mrf.mxu0
        %1452 = vmatprep.mubr.bf16.mxu0 0
        %1453 = vmatmul.mubr.bf16.gmra.mxu0 %v1305
        %v1454 = vpop.f32.mrf.mxu0
        %v1455 = vadd.f32 %v1234, %v1454
        %v1456 = vpop.f32.mrf.mxu0
        %v1457 = vpop.f32.mrf.mxu0
        %v1458 = vadd.f32 %v1234, %v1457
        %v1459 = vpop.f32.mrf.mxu0
        %1460 = vmatprep.mubr.bf16.mxu0 0
        %1461 = vmatmul.mubr.bf16.gmra.mxu0 %v1306
        %v1462 = vpop.f32.mrf.mxu0
        %v1463 = vadd.f32 %v1234, %v1462
        %v1464 = vpop.f32.mrf.mxu0
        %v1465 = vpop.f32.mrf.mxu0
        %v1466 = vadd.f32 %v1234, %v1465
        %v1467 = vpop.f32.mrf.mxu0
        %1468 = vmatprep.mubr.bf16.mxu0 0
        %1469 = vmatmul.mubr.bf16.gmra.mxu0 %v1307
        %v1470 = vpop.f32.mrf.mxu0
        %v1471 = vadd.f32 %v1234, %v1470
        %v1472 = vpop.f32.mrf.mxu0
        %v1473 = vpop.f32.mrf.mxu0
        %v1474 = vadd.f32 %v1234, %v1473
        %v1475 = vpop.f32.mrf.mxu0
        %1476 = vmatprep.mubr.bf16.mxu0 0
        %1477 = vmatmul.mubr.bf16.gmra.mxu0 %v1308
        %v1478 = vpop.f32.mrf.mxu0
        %v1479 = vadd.f32 %v1234, %v1478
        %v1480 = vpop.f32.mrf.mxu0
        %v1481 = vpop.f32.mrf.mxu0
        %v1482 = vadd.f32 %v1234, %v1481
        %v1483 = vpop.f32.mrf.mxu0
        %1484 = vmatprep.mubr.bf16.mxu0 0
        %1485 = vmatmul.mubr.bf16.gmra.mxu0 %v1309
        %v1486 = vpop.f32.mrf.mxu0
        %v1487 = vadd.f32 %v1234, %v1486
        %v1488 = vpop.f32.mrf.mxu0
        %v1489 = vpop.f32.mrf.mxu0
        %v1490 = vadd.f32 %v1234, %v1489
        %v1491 = vpop.f32.mrf.mxu0
        %1492 = vmatprep.mubr.bf16.mxu0 0
        %1493 = vmatmul.mubr.bf16.gmra.mxu0 %v1310
        %v1494 = vpop.f32.mrf.mxu0
        %v1495 = vadd.f32 %v1234, %v1494
        %v1496 = vpop.f32.mrf.mxu0
        %v1497 = vpop.f32.mrf.mxu0
        %v1498 = vadd.f32 %v1234, %v1497
        %v1499 = vpop.f32.mrf.mxu0
        %1500 = vmatprep.mubr.bf16.mxu0 0
        %1501 = vmatmul.mubr.bf16.gmra.mxu0 %v1311
        %v1502 = vpop.f32.mrf.mxu0
        %v1503 = vadd.f32 %v1234, %v1502
        %v1504 = vpop.f32.mrf.mxu0
        %v1505 = vpop.f32.mrf.mxu0
        %v1506 = vadd.f32 %v1234, %v1505
        %v1507 = vpop.f32.mrf.mxu0
        %1508 = vmatprep.mubr.bf16.mxu0 0
        %1509 = vmatmul.mubr.bf16.gmra.mxu0 %v1312
        %v1510 = vpop.f32.mrf.mxu0
        %v1511 = vadd.f32 %v1234, %v1510
        %v1512 = vpop.f32.mrf.mxu0
        %v1513 = vpop.f32.mrf.mxu0
        %v1514 = vadd.f32 %v1234, %v1513
        %v1515 = vpop.f32.mrf.mxu0
        %1516 = vmatprep.mubr.bf16.mxu0 0
        %1517 = vmatmul.mubr.bf16.gmra.mxu0 %v1313
        %v1518 = vpop.f32.mrf.mxu0
        %v1519 = vadd.f32 %v1234, %v1518
        %v1520 = vpop.f32.mrf.mxu0
        %v1521 = vpop.f32.mrf.mxu0
        %v1522 = vadd.f32 %v1234, %v1521
        %v1523 = vpop.f32.mrf.mxu0
        %1524 = vmatprep.mubr.bf16.mxu0 0
        %1525 = vmatmul.mubr.bf16.gmra.mxu0 %v1314
        %v1526 = vpop.f32.mrf.mxu0
        %v1527 = vadd.f32 %v1234, %v1526
        %v1528 = vpop.f32.mrf.mxu0
        %v1529 = vpop.f32.mrf.mxu0
        %v1530 = vadd.f32 %v1234, %v1529
        %v1531 = vpop.f32.mrf.mxu0
        %1532 = vmatprep.mubr.bf16.mxu0 0
        %1533 = vmatmul.mubr.bf16.gmra.mxu0 %v1315
        %v1534 = vpop.f32.mrf.mxu0
        %v1535 = vadd.f32 %v1234, %v1534
        %v1536 = vpop.f32.mrf.mxu0
        %v1537 = vpop.f32.mrf.mxu0
        %v1538 = vadd.f32 %v1234, %v1537
        %v1539 = vpop.f32.mrf.mxu0
        %1540 = vdwg.mxu0
        %v1541 = vpack.c.bf16 %v1418, %v1415
        %v1542 = vpack.c.bf16 %v1426, %v1423
        %v1543 = vpack.c.bf16 %v1434, %v1431
        %v1544 = vpack.c.bf16 %v1442, %v1439
        %v1545 = vpack.c.bf16 %v1450, %v1447
        %v1546 = vpack.c.bf16 %v1458, %v1455
        %v1547 = vpack.c.bf16 %v1466, %v1463
        %v1548 = vpack.c.bf16 %v1474, %v1471
        %v1549 = vpack.c.bf16 %v1482, %v1479
        %v1550 = vpack.c.bf16 %v1490, %v1487
        %v1551 = vpack.c.bf16 %v1498, %v1495
        %v1552 = vpack.c.bf16 %v1506, %v1503
        %v1553 = vpack.c.bf16 %v1514, %v1511
        %v1554 = vpack.c.bf16 %v1522, %v1519
        %v1555 = vpack.c.bf16 %v1530, %v1527
        %v1556 = vpack.c.bf16 %v1538, %v1535
        %v1557 = vld [vmem:[#allocation2] sm:$0xf]
        %v1558 = vld [vmem:[#allocation2 + $0x4] sm:$0xf]
        %v1559 = vld [vmem:[#allocation2 + $0x8] sm:$0xf]
        %v1560 = vld [vmem:[#allocation2 + $0xc] sm:$0xf]
        %v1561 = vld [vmem:[#allocation2 + $0x10] sm:$0xf]
        %v1562 = vld [vmem:[#allocation2 + $0x14] sm:$0xf]
        %v1563 = vld [vmem:[#allocation2 + $0x18] sm:$0xf]
        %v1564 = vld [vmem:[#allocation2 + $0x1c] sm:$0xf]
        %v1565 = vld [vmem:[#allocation2 + $0x20] sm:$0xf]
        %v1566 = vld [vmem:[#allocation2 + $0x24] sm:$0xf]
        %v1567 = vld [vmem:[#allocation2 + $0x28] sm:$0xf]
        %v1568 = vld [vmem:[#allocation2 + $0x2c] sm:$0xf]
        %v1569 = vld [vmem:[#allocation2 + $0x30] sm:$0xf]
        %v1570 = vld [vmem:[#allocation2 + $0x34] sm:$0xf]
        %v1571 = vld [vmem:[#allocation2 + $0x38] sm:$0xf]
        %v1572 = vld [vmem:[#allocation2 + $0x3c] sm:$0xf]
        %v1573 = vld [vmem:[#allocation2 + $0x40] sm:$0xf]
        %v1574 = vld [vmem:[#allocation2 + $0x44] sm:$0xf]
        %v1575 = vld [vmem:[#allocation2 + $0x48] sm:$0xf]
        %v1576 = vld [vmem:[#allocation2 + $0x4c] sm:$0xf]
        %v1577 = vld [vmem:[#allocation2 + $0x50] sm:$0xf]
        %v1578 = vld [vmem:[#allocation2 + $0x54] sm:$0xf]
        %v1579 = vld [vmem:[#allocation2 + $0x58] sm:$0xf]
        %v1580 = vld [vmem:[#allocation2 + $0x5c] sm:$0xf]
        %v1581 = vld [vmem:[#allocation2 + $0x60] sm:$0xf]
        %v1582 = vld [vmem:[#allocation2 + $0x64] sm:$0xf]
        %v1583 = vld [vmem:[#allocation2 + $0x68] sm:$0xf]
        %v1584 = vld [vmem:[#allocation2 + $0x6c] sm:$0xf]
        %v1585 = vld [vmem:[#allocation2 + $0x70] sm:$0xf]
        %v1586 = vld [vmem:[#allocation2 + $0x74] sm:$0xf]
        %v1587 = vld [vmem:[#allocation2 + $0x78] sm:$0xf]
        %v1588 = vld [vmem:[#allocation2 + $0x7c] sm:$0xf]
        %v1589 = vld [vmem:[#allocation3] sm:$0xf]
        %v1590 = vld [vmem:[#allocation3 + $0x4] sm:$0xf]
        %v1591 = vld [vmem:[#allocation3 + $0x8] sm:$0xf]
        %v1592 = vld [vmem:[#allocation3 + $0xc] sm:$0xf]
        %v1593 = vld [vmem:[#allocation3 + $0x10] sm:$0xf]
        %v1594 = vld [vmem:[#allocation3 + $0x14] sm:$0xf]
        %v1595 = vld [vmem:[#allocation3 + $0x18] sm:$0xf]
        %v1596 = vld [vmem:[#allocation3 + $0x1c] sm:$0xf]
        %v1597 = vld [vmem:[#allocation3 + $0x20] sm:$0xf]
        %v1598 = vld [vmem:[#allocation3 + $0x24] sm:$0xf]
        %v1599 = vld [vmem:[#allocation3 + $0x28] sm:$0xf]
        %v1600 = vld [vmem:[#allocation3 + $0x2c] sm:$0xf]
        %v1601 = vld [vmem:[#allocation3 + $0x30] sm:$0xf]
        %v1602 = vld [vmem:[#allocation3 + $0x34] sm:$0xf]
        %v1603 = vld [vmem:[#allocation3 + $0x38] sm:$0xf]
        %v1604 = vld [vmem:[#allocation3 + $0x3c] sm:$0xf]
        %v1605 = vld [vmem:[#allocation3 + $0x40] sm:$0xf]
        %v1606 = vld [vmem:[#allocation3 + $0x44] sm:$0xf]
        %v1607 = vld [vmem:[#allocation3 + $0x48] sm:$0xf]
        %v1608 = vld [vmem:[#allocation3 + $0x4c] sm:$0xf]
        %v1609 = vld [vmem:[#allocation3 + $0x50] sm:$0xf]
        %v1610 = vld [vmem:[#allocation3 + $0x54] sm:$0xf]
        %v1611 = vld [vmem:[#allocation3 + $0x58] sm:$0xf]
        %v1612 = vld [vmem:[#allocation3 + $0x5c] sm:$0xf]
        %v1613 = vld [vmem:[#allocation3 + $0x60] sm:$0xf]
        %v1614 = vld [vmem:[#allocation3 + $0x64] sm:$0xf]
        %v1615 = vld [vmem:[#allocation3 + $0x68] sm:$0xf]
        %v1616 = vld [vmem:[#allocation3 + $0x6c] sm:$0xf]
        %v1617 = vld [vmem:[#allocation3 + $0x70] sm:$0xf]
        %v1618 = vld [vmem:[#allocation3 + $0x74] sm:$0xf]
        %v1619 = vld [vmem:[#allocation3 + $0x78] sm:$0xf]
        %v1620 = vld [vmem:[#allocation3 + $0x7c] sm:$0xf]
        %v1653 = vunpack.c.l.b16 %v1557
        %v1654 = vunpack.c.l.b16 %v1558
        %v1655 = vunpack.c.l.b16 %v1559
        %v1656 = vunpack.c.l.b16 %v1560
        %v1657 = vunpack.c.l.b16 %v1561
        %v1658 = vunpack.c.l.b16 %v1562
        %v1659 = vunpack.c.l.b16 %v1563
        %v1660 = vunpack.c.l.b16 %v1564
        %v1661 = vunpack.c.l.b16 %v1565
        %v1662 = vunpack.c.l.b16 %v1566
        %v1663 = vunpack.c.l.b16 %v1567
        %v1664 = vunpack.c.l.b16 %v1568
        %v1665 = vunpack.c.l.b16 %v1569
        %v1666 = vunpack.c.l.b16 %v1570
        %v1667 = vunpack.c.l.b16 %v1571
        %v1668 = vunpack.c.l.b16 %v1572
        %v1669 = vunpack.c.l.b16 %v1573
        %v1670 = vunpack.c.l.b16 %v1574
        %v1671 = vunpack.c.l.b16 %v1575
        %v1672 = vunpack.c.l.b16 %v1576
        %v1673 = vunpack.c.l.b16 %v1577
        %v1674 = vunpack.c.l.b16 %v1578
        %v1675 = vunpack.c.l.b16 %v1579
        %v1676 = vunpack.c.l.b16 %v1580
        %v1677 = vunpack.c.l.b16 %v1581
        %v1678 = vunpack.c.l.b16 %v1582
        %v1679 = vunpack.c.l.b16 %v1583
        %v1680 = vunpack.c.l.b16 %v1584
        %v1681 = vunpack.c.l.b16 %v1585
        %v1682 = vunpack.c.l.b16 %v1586
        %v1683 = vunpack.c.l.b16 %v1587
        %v1684 = vunpack.c.l.b16 %v1588
        %v1685 = vpack.c.b16 %v1654, %v1653
        %v1686 = vpack.c.b16 %v1656, %v1655
        %v1687 = vpack.c.b16 %v1658, %v1657
        %v1688 = vpack.c.b16 %v1660, %v1659
        %v1689 = vpack.c.b16 %v1662, %v1661
        %v1690 = vpack.c.b16 %v1664, %v1663
        %v1691 = vpack.c.b16 %v1666, %v1665
        %v1692 = vpack.c.b16 %v1668, %v1667
        %v1693 = vpack.c.b16 %v1670, %v1669
        %v1694 = vpack.c.b16 %v1672, %v1671
        %v1695 = vpack.c.b16 %v1674, %v1673
        %v1696 = vpack.c.b16 %v1676, %v1675
        %v1697 = vpack.c.b16 %v1678, %v1677
        %v1698 = vpack.c.b16 %v1680, %v1679
        %v1699 = vpack.c.b16 %v1682, %v1681
        %v1700 = vpack.c.b16 %v1684, %v1683
        %1717 = vmatprep.subr.bf16.mxu0 0
        %1718 = vmatpush1.bf16.xpose.msra.mxu0 %v1692
        %1719 = vmatprep.subr.bf16.mxu0 0
        %1720 = vmatpush1.bf16.xpose.msra.mxu0 %v1691
        %1721 = vmatprep.subr.bf16.mxu0 0
        %1722 = vmatpush1.bf16.xpose.msra.mxu0 %v1690
        %1723 = vmatprep.subr.bf16.mxu0 0
        %1724 = vmatpush1.bf16.xpose.msra.mxu0 %v1689
        %1725 = vmatprep.subr.bf16.mxu0 0
        %1726 = vmatpush1.bf16.xpose.msra.mxu0 %v1688
        %1727 = vmatprep.subr.bf16.mxu0 0
        %1728 = vmatpush1.bf16.xpose.msra.mxu0 %v1687
        %1729 = vmatprep.subr.bf16.mxu0 0
        %1730 = vmatpush1.bf16.xpose.msra.mxu0 %v1686
        %1731 = vmatprep.subr.bf16.mxu0 0
        %1732 = vmatpush1.bf16.xpose.msra.mxu0 %v1685
        %1733 = vmatprep.subr.bf16.mxu0 0
        %1734 = vmatpush2.bf16.xpose.msra.mxu0 %v1700
        %1735 = vmatprep.subr.bf16.mxu0 0
        %1736 = vmatpush2.bf16.xpose.msra.mxu0 %v1699
        %1737 = vmatprep.subr.bf16.mxu0 0
        %1738 = vmatpush2.bf16.xpose.msra.mxu0 %v1698
        %1739 = vmatprep.subr.bf16.mxu0 0
        %1740 = vmatpush2.bf16.xpose.msra.mxu0 %v1697
        %1741 = vmatprep.subr.bf16.mxu0 0
        %1742 = vmatpush2.bf16.xpose.msra.mxu0 %v1696
        %1743 = vmatprep.subr.bf16.mxu0 0
        %1744 = vmatpush2.bf16.xpose.msra.mxu0 %v1695
        %1745 = vmatprep.subr.bf16.mxu0 0
        %1746 = vmatpush2.bf16.xpose.msra.mxu0 %v1694
        %1747 = vmatprep.subr.bf16.mxu0 0
        %1748 = vmatpush2.bf16.xpose.msra.mxu0 %v1693
        %1749 = vmatprep.mubr.bf16.mxu0 0
        %1750 = vmatmul.mubr.bf16.gmra.mxu0 %v1541
        %v1751 = vpop.f32.mrf.mxu0
        %v1752 = vadd.f32 0.0, %v1751
        %v1753 = vpop.f32.mrf.mxu0
        %v1754 = vadd.f32 0.0, %v1753
        %v1755 = vpop.f32.mrf.mxu0
        %v1756 = vadd.f32 0.0, %v1755
        %v1757 = vpop.f32.mrf.mxu0
        %v1758 = vadd.f32 0.0, %v1757
        %1759 = vmatprep.mubr.bf16.mxu0 0
        %1760 = vmatmul.mubr.bf16.gmra.mxu0 %v1542
        %v1761 = vpop.f32.mrf.mxu0
        %v1762 = vadd.f32 0.0, %v1761
        %v1763 = vpop.f32.mrf.mxu0
        %v1764 = vadd.f32 0.0, %v1763
        %v1765 = vpop.f32.mrf.mxu0
        %v1766 = vadd.f32 0.0, %v1765
        %v1767 = vpop.f32.mrf.mxu0
        %v1768 = vadd.f32 0.0, %v1767
        %1769 = vmatprep.mubr.bf16.mxu0 0
        %1770 = vmatmul.mubr.bf16.gmra.mxu0 %v1543
        %v1771 = vpop.f32.mrf.mxu0
        %v1772 = vadd.f32 0.0, %v1771
        %v1773 = vpop.f32.mrf.mxu0
        %v1774 = vadd.f32 0.0, %v1773
        %v1775 = vpop.f32.mrf.mxu0
        %v1776 = vadd.f32 0.0, %v1775
        %v1777 = vpop.f32.mrf.mxu0
        %v1778 = vadd.f32 0.0, %v1777
        %1779 = vmatprep.mubr.bf16.mxu0 0
        %1780 = vmatmul.mubr.bf16.gmra.mxu0 %v1544
        %v1781 = vpop.f32.mrf.mxu0
        %v1782 = vadd.f32 0.0, %v1781
        %v1783 = vpop.f32.mrf.mxu0
        %v1784 = vadd.f32 0.0, %v1783
        %v1785 = vpop.f32.mrf.mxu0
        %v1786 = vadd.f32 0.0, %v1785
        %v1787 = vpop.f32.mrf.mxu0
        %v1788 = vadd.f32 0.0, %v1787
        %1789 = vmatprep.mubr.bf16.mxu0 0
        %1790 = vmatmul.mubr.bf16.gmra.mxu0 %v1545
        %v1791 = vpop.f32.mrf.mxu0
        %v1792 = vadd.f32 0.0, %v1791
        %v1793 = vpop.f32.mrf.mxu0
        %v1794 = vadd.f32 0.0, %v1793
        %v1795 = vpop.f32.mrf.mxu0
        %v1796 = vadd.f32 0.0, %v1795
        %v1797 = vpop.f32.mrf.mxu0
        %v1798 = vadd.f32 0.0, %v1797
        %1799 = vmatprep.mubr.bf16.mxu0 0
        %1800 = vmatmul.mubr.bf16.gmra.mxu0 %v1546
        %v1801 = vpop.f32.mrf.mxu0
        %v1802 = vadd.f32 0.0, %v1801
        %v1803 = vpop.f32.mrf.mxu0
        %v1804 = vadd.f32 0.0, %v1803
        %v1805 = vpop.f32.mrf.mxu0
        %v1806 = vadd.f32 0.0, %v1805
        %v1807 = vpop.f32.mrf.mxu0
        %v1808 = vadd.f32 0.0, %v1807
        %1809 = vmatprep.mubr.bf16.mxu0 0
        %1810 = vmatmul.mubr.bf16.gmra.mxu0 %v1547
        %v1811 = vpop.f32.mrf.mxu0
        %v1812 = vadd.f32 0.0, %v1811
        %v1813 = vpop.f32.mrf.mxu0
        %v1814 = vadd.f32 0.0, %v1813
        %v1815 = vpop.f32.mrf.mxu0
        %v1816 = vadd.f32 0.0, %v1815
        %v1817 = vpop.f32.mrf.mxu0
        %v1818 = vadd.f32 0.0, %v1817
        %1819 = vmatprep.mubr.bf16.mxu0 0
        %1820 = vmatmul.mubr.bf16.gmra.mxu0 %v1548
        %v1821 = vpop.f32.mrf.mxu0
        %v1822 = vadd.f32 0.0, %v1821
        %v1823 = vpop.f32.mrf.mxu0
        %v1824 = vadd.f32 0.0, %v1823
        %v1825 = vpop.f32.mrf.mxu0
        %v1826 = vadd.f32 0.0, %v1825
        %v1827 = vpop.f32.mrf.mxu0
        %v1828 = vadd.f32 0.0, %v1827
        %1829 = vmatprep.mubr.bf16.mxu0 0
        %1830 = vmatmul.mubr.bf16.gmra.mxu0 %v1549
        %v1831 = vpop.f32.mrf.mxu0
        %v1832 = vadd.f32 0.0, %v1831
        %v1833 = vpop.f32.mrf.mxu0
        %v1834 = vadd.f32 0.0, %v1833
        %v1835 = vpop.f32.mrf.mxu0
        %v1836 = vadd.f32 0.0, %v1835
        %v1837 = vpop.f32.mrf.mxu0
        %v1838 = vadd.f32 0.0, %v1837
        %1839 = vmatprep.mubr.bf16.mxu0 0
        %1840 = vmatmul.mubr.bf16.gmra.mxu0 %v1550
        %v1841 = vpop.f32.mrf.mxu0
        %v1842 = vadd.f32 0.0, %v1841
        %v1843 = vpop.f32.mrf.mxu0
        %v1844 = vadd.f32 0.0, %v1843
        %v1845 = vpop.f32.mrf.mxu0
        %v1846 = vadd.f32 0.0, %v1845
        %v1847 = vpop.f32.mrf.mxu0
        %v1848 = vadd.f32 0.0, %v1847
        %1849 = vmatprep.mubr.bf16.mxu0 0
        %1850 = vmatmul.mubr.bf16.gmra.mxu0 %v1551
        %v1851 = vpop.f32.mrf.mxu0
        %v1852 = vadd.f32 0.0, %v1851
        %v1853 = vpop.f32.mrf.mxu0
        %v1854 = vadd.f32 0.0, %v1853
        %v1855 = vpop.f32.mrf.mxu0
        %v1856 = vadd.f32 0.0, %v1855
        %v1857 = vpop.f32.mrf.mxu0
        %v1858 = vadd.f32 0.0, %v1857
        %1859 = vmatprep.mubr.bf16.mxu0 0
        %1860 = vmatmul.mubr.bf16.gmra.mxu0 %v1552
        %v1861 = vpop.f32.mrf.mxu0
        %v1862 = vadd.f32 0.0, %v1861
        %v1863 = vpop.f32.mrf.mxu0
        %v1864 = vadd.f32 0.0, %v1863
        %v1865 = vpop.f32.mrf.mxu0
        %v1866 = vadd.f32 0.0, %v1865
        %v1867 = vpop.f32.mrf.mxu0
        %v1868 = vadd.f32 0.0, %v1867
        %1869 = vmatprep.mubr.bf16.mxu0 0
        %1870 = vmatmul.mubr.bf16.gmra.mxu0 %v1553
        %v1871 = vpop.f32.mrf.mxu0
        %v1872 = vadd.f32 0.0, %v1871
        %v1873 = vpop.f32.mrf.mxu0
        %v1874 = vadd.f32 0.0, %v1873
        %v1875 = vpop.f32.mrf.mxu0
        %v1876 = vadd.f32 0.0, %v1875
        %v1877 = vpop.f32.mrf.mxu0
        %v1878 = vadd.f32 0.0, %v1877
        %1879 = vmatprep.mubr.bf16.mxu0 0
        %1880 = vmatmul.mubr.bf16.gmra.mxu0 %v1554
        %v1881 = vpop.f32.mrf.mxu0
        %v1882 = vadd.f32 0.0, %v1881
        %v1883 = vpop.f32.mrf.mxu0
        %v1884 = vadd.f32 0.0, %v1883
        %v1885 = vpop.f32.mrf.mxu0
        %v1886 = vadd.f32 0.0, %v1885
        %v1887 = vpop.f32.mrf.mxu0
        %v1888 = vadd.f32 0.0, %v1887
        %1889 = vmatprep.mubr.bf16.mxu0 0
        %1890 = vmatmul.mubr.bf16.gmra.mxu0 %v1555
        %v1891 = vpop.f32.mrf.mxu0
        %v1892 = vadd.f32 0.0, %v1891
        %v1893 = vpop.f32.mrf.mxu0
        %v1894 = vadd.f32 0.0, %v1893
        %v1895 = vpop.f32.mrf.mxu0
        %v1896 = vadd.f32 0.0, %v1895
        %v1897 = vpop.f32.mrf.mxu0
        %v1898 = vadd.f32 0.0, %v1897
        %1899 = vmatprep.mubr.bf16.mxu0 0
        %1900 = vmatmul.mubr.bf16.gmra.mxu0 %v1556
        %v1901 = vpop.f32.mrf.mxu0
        %v1902 = vadd.f32 0.0, %v1901
        %v1903 = vpop.f32.mrf.mxu0
        %v1904 = vadd.f32 0.0, %v1903
        %v1905 = vpop.f32.mrf.mxu0
        %v1906 = vadd.f32 0.0, %v1905
        %v1907 = vpop.f32.mrf.mxu0
        %v1908 = vadd.f32 0.0, %v1907
        %1909 = vdwg.mxu0
        %v1910 = vmax.f32 %v1752, %v1754
        %1911 = vmax.xlane.f32.xlu0 %v1910
        %v1912 = vpop.xlane.xlu0 %1911
        %v1913 = vmax.f32 %v1756, %v1758
        %1914 = vmax.xlane.f32.xlu0 %v1913
        %v1915 = vpop.xlane.xlu0 %1914
        %v1916 = vmax.f32 %v1762, %v1764
        %1917 = vmax.xlane.f32.xlu0 %v1916
        %v1918 = vpop.xlane.xlu0 %1917
        %v1919 = vmax.f32 %v1766, %v1768
        %1920 = vmax.xlane.f32.xlu0 %v1919
        %v1921 = vpop.xlane.xlu0 %1920
        %v1922 = vmax.f32 %v1772, %v1774
        %1923 = vmax.xlane.f32.xlu0 %v1922
        %v1924 = vpop.xlane.xlu0 %1923
        %v1925 = vmax.f32 %v1776, %v1778
        %1926 = vmax.xlane.f32.xlu0 %v1925
        %v1927 = vpop.xlane.xlu0 %1926
        %v1928 = vmax.f32 %v1782, %v1784
        %1929 = vmax.xlane.f32.xlu0 %v1928
        %v1930 = vpop.xlane.xlu0 %1929
        %v1931 = vmax.f32 %v1786, %v1788
        %1932 = vmax.xlane.f32.xlu0 %v1931
        %v1933 = vpop.xlane.xlu0 %1932
        %v1934 = vmax.f32 %v1792, %v1794
        %1935 = vmax.xlane.f32.xlu0 %v1934
        %v1936 = vpop.xlane.xlu0 %1935
        %v1937 = vmax.f32 %v1796, %v1798
        %1938 = vmax.xlane.f32.xlu0 %v1937
        %v1939 = vpop.xlane.xlu0 %1938
        %v1940 = vmax.f32 %v1802, %v1804
        %1941 = vmax.xlane.f32.xlu0 %v1940
        %v1942 = vpop.xlane.xlu0 %1941
        %v1943 = vmax.f32 %v1806, %v1808
        %1944 = vmax.xlane.f32.xlu0 %v1943
        %v1945 = vpop.xlane.xlu0 %1944
        %v1946 = vmax.f32 %v1812, %v1814
        %1947 = vmax.xlane.f32.xlu0 %v1946
        %v1948 = vpop.xlane.xlu0 %1947
        %v1949 = vmax.f32 %v1816, %v1818
        %1950 = vmax.xlane.f32.xlu0 %v1949
        %v1951 = vpop.xlane.xlu0 %1950
        %v1952 = vmax.f32 %v1822, %v1824
        %1953 = vmax.xlane.f32.xlu0 %v1952
        %v1954 = vpop.xlane.xlu0 %1953
        %v1955 = vmax.f32 %v1826, %v1828
        %1956 = vmax.xlane.f32.xlu0 %v1955
        %v1957 = vpop.xlane.xlu0 %1956
        %v1958 = vmax.f32 %v1832, %v1834
        %1959 = vmax.xlane.f32.xlu0 %v1958
        %v1960 = vpop.xlane.xlu0 %1959
        %v1961 = vmax.f32 %v1836, %v1838
        %1962 = vmax.xlane.f32.xlu0 %v1961
        %v1963 = vpop.xlane.xlu0 %1962
        %v1964 = vmax.f32 %v1842, %v1844
        %1965 = vmax.xlane.f32.xlu0 %v1964
        %v1966 = vpop.xlane.xlu0 %1965
        %v1967 = vmax.f32 %v1846, %v1848
        %1968 = vmax.xlane.f32.xlu0 %v1967
        %v1969 = vpop.xlane.xlu0 %1968
        %v1970 = vmax.f32 %v1852, %v1854
        %1971 = vmax.xlane.f32.xlu0 %v1970
        %v1972 = vpop.xlane.xlu0 %1971
        %v1973 = vmax.f32 %v1856, %v1858
        %1974 = vmax.xlane.f32.xlu0 %v1973
        %v1975 = vpop.xlane.xlu0 %1974
        %v1976 = vmax.f32 %v1862, %v1864
        %1977 = vmax.xlane.f32.xlu0 %v1976
        %v1978 = vpop.xlane.xlu0 %1977
        %v1979 = vmax.f32 %v1866, %v1868
        %1980 = vmax.xlane.f32.xlu0 %v1979
        %v1981 = vpop.xlane.xlu0 %1980
        %v1982 = vmax.f32 %v1872, %v1874
        %1983 = vmax.xlane.f32.xlu0 %v1982
        %v1984 = vpop.xlane.xlu0 %1983
        %v1985 = vmax.f32 %v1876, %v1878
        %1986 = vmax.xlane.f32.xlu0 %v1985
        %v1987 = vpop.xlane.xlu0 %1986
        %v1988 = vmax.f32 %v1882, %v1884
        %1989 = vmax.xlane.f32.xlu0 %v1988
        %v1990 = vpop.xlane.xlu0 %1989
        %v1991 = vmax.f32 %v1886, %v1888
        %1992 = vmax.xlane.f32.xlu0 %v1991
        %v1993 = vpop.xlane.xlu0 %1992
        %v1994 = vmax.f32 %v1892, %v1894
        %1995 = vmax.xlane.f32.xlu0 %v1994
        %v1996 = vpop.xlane.xlu0 %1995
        %v1997 = vmax.f32 %v1896, %v1898
        %1998 = vmax.xlane.f32.xlu0 %v1997
        %v1999 = vpop.xlane.xlu0 %1998
        %v2000 = vmax.f32 %v1902, %v1904
        %2001 = vmax.xlane.f32.xlu0 %v2000
        %v2002 = vpop.xlane.xlu0 %2001
        %v2003 = vmax.f32 %v1906, %v1908
        %2004 = vmax.xlane.f32.xlu0 %v2003
        %v2005 = vpop.xlane.xlu0 %2004
        %v2006 = vsub.f32 %v1752, %v1912
        %v2007 = vsub.f32 %v1754, %v1912
        %v2008 = vsub.f32 %v1756, %v1915
        %v2009 = vsub.f32 %v1758, %v1915
        %v2010 = vsub.f32 %v1762, %v1918
        %v2011 = vsub.f32 %v1764, %v1918
        %v2012 = vsub.f32 %v1766, %v1921
        %v2013 = vsub.f32 %v1768, %v1921
        %v2014 = vsub.f32 %v1772, %v1924
        %v2015 = vsub.f32 %v1774, %v1924
        %v2016 = vsub.f32 %v1776, %v1927
        %v2017 = vsub.f32 %v1778, %v1927
        %v2018 = vsub.f32 %v1782, %v1930
        %v2019 = vsub.f32 %v1784, %v1930
        %v2020 = vsub.f32 %v1786, %v1933
        %v2021 = vsub.f32 %v1788, %v1933
        %v2022 = vsub.f32 %v1792, %v1936
        %v2023 = vsub.f32 %v1794, %v1936
        %v2024 = vsub.f32 %v1796, %v1939
        %v2025 = vsub.f32 %v1798, %v1939
        %v2026 = vsub.f32 %v1802, %v1942
        %v2027 = vsub.f32 %v1804, %v1942
        %v2028 = vsub.f32 %v1806, %v1945
        %v2029 = vsub.f32 %v1808, %v1945
        %v2030 = vsub.f32 %v1812, %v1948
        %v2031 = vsub.f32 %v1814, %v1948
        %v2032 = vsub.f32 %v1816, %v1951
        %v2033 = vsub.f32 %v1818, %v1951
        %v2034 = vsub.f32 %v1822, %v1954
        %v2035 = vsub.f32 %v1824, %v1954
        %v2036 = vsub.f32 %v1826, %v1957
        %v2037 = vsub.f32 %v1828, %v1957
        %v2038 = vsub.f32 %v1832, %v1960
        %v2039 = vsub.f32 %v1834, %v1960
        %v2040 = vsub.f32 %v1836, %v1963
        %v2041 = vsub.f32 %v1838, %v1963
        %v2042 = vsub.f32 %v1842, %v1966
        %v2043 = vsub.f32 %v1844, %v1966
        %v2044 = vsub.f32 %v1846, %v1969
        %v2045 = vsub.f32 %v1848, %v1969
        %v2046 = vsub.f32 %v1852, %v1972
        %v2047 = vsub.f32 %v1854, %v1972
        %v2048 = vsub.f32 %v1856, %v1975
        %v2049 = vsub.f32 %v1858, %v1975
        %v2050 = vsub.f32 %v1862, %v1978
        %v2051 = vsub.f32 %v1864, %v1978
        %v2052 = vsub.f32 %v1866, %v1981
        %v2053 = vsub.f32 %v1868, %v1981
        %v2054 = vsub.f32 %v1872, %v1984
        %v2055 = vsub.f32 %v1874, %v1984
        %v2056 = vsub.f32 %v1876, %v1987
        %v2057 = vsub.f32 %v1878, %v1987
        %v2058 = vsub.f32 %v1882, %v1990
        %v2059 = vsub.f32 %v1884, %v1990
        %v2060 = vsub.f32 %v1886, %v1993
        %v2061 = vsub.f32 %v1888, %v1993
        %v2062 = vsub.f32 %v1892, %v1996
        %v2063 = vsub.f32 %v1894, %v1996
        %v2064 = vsub.f32 %v1896, %v1999
        %v2065 = vsub.f32 %v1898, %v1999
        %v2066 = vsub.f32 %v1902, %v2002
        %v2067 = vsub.f32 %v1904, %v2002
        %v2068 = vsub.f32 %v1906, %v2005
        %v2069 = vsub.f32 %v1908, %v2005
        %v2070 = vmul.f32 %v2006, 1.442695
        %v2071 = vpow.pop %v2070
        %v2072 = vmul.f32 %v2007, 1.442695
        %v2073 = vpow.pop %v2072
        %v2074 = vmul.f32 %v2008, 1.442695
        %v2075 = vpow.pop %v2074
        %v2076 = vmul.f32 %v2009, 1.442695
        %v2077 = vpow.pop %v2076
        %v2078 = vmul.f32 %v2010, 1.442695
        %v2079 = vpow.pop %v2078
        %v2080 = vmul.f32 %v2011, 1.442695
        %v2081 = vpow.pop %v2080
        %v2082 = vmul.f32 %v2012, 1.442695
        %v2083 = vpow.pop %v2082
        %v2084 = vmul.f32 %v2013, 1.442695
        %v2085 = vpow.pop %v2084
        %v2086 = vmul.f32 %v2014, 1.442695
        %v2087 = vpow.pop %v2086
        %v2088 = vmul.f32 %v2015, 1.442695
        %v2089 = vpow.pop %v2088
        %v2090 = vmul.f32 %v2016, 1.442695
        %v2091 = vpow.pop %v2090
        %v2092 = vmul.f32 %v2017, 1.442695
        %v2093 = vpow.pop %v2092
        %v2094 = vmul.f32 %v2018, 1.442695
        %v2095 = vpow.pop %v2094
        %v2096 = vmul.f32 %v2019, 1.442695
        %v2097 = vpow.pop %v2096
        %v2098 = vmul.f32 %v2020, 1.442695
        %v2099 = vpow.pop %v2098
        %v2100 = vmul.f32 %v2021, 1.442695
        %v2101 = vpow.pop %v2100
        %v2102 = vmul.f32 %v2022, 1.442695
        %v2103 = vpow.pop %v2102
        %v2104 = vmul.f32 %v2023, 1.442695
        %v2105 = vpow.pop %v2104
        %v2106 = vmul.f32 %v2024, 1.442695
        %v2107 = vpow.pop %v2106
        %v2108 = vmul.f32 %v2025, 1.442695
        %v2109 = vpow.pop %v2108
        %v2110 = vmul.f32 %v2026, 1.442695
        %v2111 = vpow.pop %v2110
        %v2112 = vmul.f32 %v2027, 1.442695
        %v2113 = vpow.pop %v2112
        %v2114 = vmul.f32 %v2028, 1.442695
        %v2115 = vpow.pop %v2114
        %v2116 = vmul.f32 %v2029, 1.442695
        %v2117 = vpow.pop %v2116
        %v2118 = vmul.f32 %v2030, 1.442695
        %v2119 = vpow.pop %v2118
        %v2120 = vmul.f32 %v2031, 1.442695
        %v2121 = vpow.pop %v2120
        %v2122 = vmul.f32 %v2032, 1.442695
        %v2123 = vpow.pop %v2122
        %v2124 = vmul.f32 %v2033, 1.442695
        %v2125 = vpow.pop %v2124
        %v2126 = vmul.f32 %v2034, 1.442695
        %v2127 = vpow.pop %v2126
        %v2128 = vmul.f32 %v2035, 1.442695
        %v2129 = vpow.pop %v2128
        %v2130 = vmul.f32 %v2036, 1.442695
        %v2131 = vpow.pop %v2130
        %v2132 = vmul.f32 %v2037, 1.442695
        %v2133 = vpow.pop %v2132
        %v2134 = vmul.f32 %v2038, 1.442695
        %v2135 = vpow.pop %v2134
        %v2136 = vmul.f32 %v2039, 1.442695
        %v2137 = vpow.pop %v2136
        %v2138 = vmul.f32 %v2040, 1.442695
        %v2139 = vpow.pop %v2138
        %v2140 = vmul.f32 %v2041, 1.442695
        %v2141 = vpow.pop %v2140
        %v2142 = vmul.f32 %v2042, 1.442695
        %v2143 = vpow.pop %v2142
        %v2144 = vmul.f32 %v2043, 1.442695
        %v2145 = vpow.pop %v2144
        %v2146 = vmul.f32 %v2044, 1.442695
        %v2147 = vpow.pop %v2146
        %v2148 = vmul.f32 %v2045, 1.442695
        %v2149 = vpow.pop %v2148
        %v2150 = vmul.f32 %v2046, 1.442695
        %v2151 = vpow.pop %v2150
        %v2152 = vmul.f32 %v2047, 1.442695
        %v2153 = vpow.pop %v2152
        %v2154 = vmul.f32 %v2048, 1.442695
        %v2155 = vpow.pop %v2154
        %v2156 = vmul.f32 %v2049, 1.442695
        %v2157 = vpow.pop %v2156
        %v2158 = vmul.f32 %v2050, 1.442695
        %v2159 = vpow.pop %v2158
        %v2160 = vmul.f32 %v2051, 1.442695
        %v2161 = vpow.pop %v2160
        %v2162 = vmul.f32 %v2052, 1.442695
        %v2163 = vpow.pop %v2162
        %v2164 = vmul.f32 %v2053, 1.442695
        %v2165 = vpow.pop %v2164
        %v2166 = vmul.f32 %v2054, 1.442695
        %v2167 = vpow.pop %v2166
        %v2168 = vmul.f32 %v2055, 1.442695
        %v2169 = vpow.pop %v2168
        %v2170 = vmul.f32 %v2056, 1.442695
        %v2171 = vpow.pop %v2170
        %v2172 = vmul.f32 %v2057, 1.442695
        %v2173 = vpow.pop %v2172
        %v2174 = vmul.f32 %v2058, 1.442695
        %v2175 = vpow.pop %v2174
        %v2176 = vmul.f32 %v2059, 1.442695
        %v2177 = vpow.pop %v2176
        %v2178 = vmul.f32 %v2060, 1.442695
        %v2179 = vpow.pop %v2178
        %v2180 = vmul.f32 %v2061, 1.442695
        %v2181 = vpow.pop %v2180
        %v2182 = vmul.f32 %v2062, 1.442695
        %v2183 = vpow.pop %v2182
        %v2184 = vmul.f32 %v2063, 1.442695
        %v2185 = vpow.pop %v2184
        %v2186 = vmul.f32 %v2064, 1.442695
        %v2187 = vpow.pop %v2186
        %v2188 = vmul.f32 %v2065, 1.442695
        %v2189 = vpow.pop %v2188
        %v2190 = vmul.f32 %v2066, 1.442695
        %v2191 = vpow.pop %v2190
        %v2192 = vmul.f32 %v2067, 1.442695
        %v2193 = vpow.pop %v2192
        %v2194 = vmul.f32 %v2068, 1.442695
        %v2195 = vpow.pop %v2194
        %v2196 = vmul.f32 %v2069, 1.442695
        %v2197 = vpow.pop %v2196
        %v2198 = vadd.f32 %v2071, %v2073
        %2199 = vadd.xlane.f32.xlu0 %v2198
        %v2200 = vpop.xlane.xlu0 %2199
        %v2201 = vadd.f32 %v2075, %v2077
        %2202 = vadd.xlane.f32.xlu0 %v2201
        %v2203 = vpop.xlane.xlu0 %2202
        %v2204 = vadd.f32 %v2079, %v2081
        %2205 = vadd.xlane.f32.xlu0 %v2204
        %v2206 = vpop.xlane.xlu0 %2205
        %v2207 = vadd.f32 %v2083, %v2085
        %2208 = vadd.xlane.f32.xlu0 %v2207
        %v2209 = vpop.xlane.xlu0 %2208
        %v2210 = vadd.f32 %v2087, %v2089
        %2211 = vadd.xlane.f32.xlu0 %v2210
        %v2212 = vpop.xlane.xlu0 %2211
        %v2213 = vadd.f32 %v2091, %v2093
        %2214 = vadd.xlane.f32.xlu0 %v2213
        %v2215 = vpop.xlane.xlu0 %2214
        %v2216 = vadd.f32 %v2095, %v2097
        %2217 = vadd.xlane.f32.xlu0 %v2216
        %v2218 = vpop.xlane.xlu0 %2217
        %v2219 = vadd.f32 %v2099, %v2101
        %2220 = vadd.xlane.f32.xlu0 %v2219
        %v2221 = vpop.xlane.xlu0 %2220
        %v2222 = vadd.f32 %v2103, %v2105
        %2223 = vadd.xlane.f32.xlu0 %v2222
        %v2224 = vpop.xlane.xlu0 %2223
        %v2225 = vadd.f32 %v2107, %v2109
        %2226 = vadd.xlane.f32.xlu0 %v2225
        %v2227 = vpop.xlane.xlu0 %2226
        %v2228 = vadd.f32 %v2111, %v2113
        %2229 = vadd.xlane.f32.xlu0 %v2228
        %v2230 = vpop.xlane.xlu0 %2229
        %v2231 = vadd.f32 %v2115, %v2117
        %2232 = vadd.xlane.f32.xlu0 %v2231
        %v2233 = vpop.xlane.xlu0 %2232
        %v2234 = vadd.f32 %v2119, %v2121
        %2235 = vadd.xlane.f32.xlu0 %v2234
        %v2236 = vpop.xlane.xlu0 %2235
        %v2237 = vadd.f32 %v2123, %v2125
        %2238 = vadd.xlane.f32.xlu0 %v2237
        %v2239 = vpop.xlane.xlu0 %2238
        %v2240 = vadd.f32 %v2127, %v2129
        %2241 = vadd.xlane.f32.xlu0 %v2240
        %v2242 = vpop.xlane.xlu0 %2241
        %v2243 = vadd.f32 %v2131, %v2133
        %2244 = vadd.xlane.f32.xlu0 %v2243
        %v2245 = vpop.xlane.xlu0 %2244
        %v2246 = vadd.f32 %v2135, %v2137
        %2247 = vadd.xlane.f32.xlu0 %v2246
        %v2248 = vpop.xlane.xlu0 %2247
        %v2249 = vadd.f32 %v2139, %v2141
        %2250 = vadd.xlane.f32.xlu0 %v2249
        %v2251 = vpop.xlane.xlu0 %2250
        %v2252 = vadd.f32 %v2143, %v2145
        %2253 = vadd.xlane.f32.xlu0 %v2252
        %v2254 = vpop.xlane.xlu0 %2253
        %v2255 = vadd.f32 %v2147, %v2149
        %2256 = vadd.xlane.f32.xlu0 %v2255
        %v2257 = vpop.xlane.xlu0 %2256
        %v2258 = vadd.f32 %v2151, %v2153
        %2259 = vadd.xlane.f32.xlu0 %v2258
        %v2260 = vpop.xlane.xlu0 %2259
        %v2261 = vadd.f32 %v2155, %v2157
        %2262 = vadd.xlane.f32.xlu0 %v2261
        %v2263 = vpop.xlane.xlu0 %2262
        %v2264 = vadd.f32 %v2159, %v2161
        %2265 = vadd.xlane.f32.xlu0 %v2264
        %v2266 = vpop.xlane.xlu0 %2265
        %v2267 = vadd.f32 %v2163, %v2165
        %2268 = vadd.xlane.f32.xlu0 %v2267
        %v2269 = vpop.xlane.xlu0 %2268
        %v2270 = vadd.f32 %v2167, %v2169
        %2271 = vadd.xlane.f32.xlu0 %v2270
        %v2272 = vpop.xlane.xlu0 %2271
        %v2273 = vadd.f32 %v2171, %v2173
        %2274 = vadd.xlane.f32.xlu0 %v2273
        %v2275 = vpop.xlane.xlu0 %2274
        %v2276 = vadd.f32 %v2175, %v2177
        %2277 = vadd.xlane.f32.xlu0 %v2276
        %v2278 = vpop.xlane.xlu0 %2277
        %v2279 = vadd.f32 %v2179, %v2181
        %2280 = vadd.xlane.f32.xlu0 %v2279
        %v2281 = vpop.xlane.xlu0 %2280
        %v2282 = vadd.f32 %v2183, %v2185
        %2283 = vadd.xlane.f32.xlu0 %v2282
        %v2284 = vpop.xlane.xlu0 %2283
        %v2285 = vadd.f32 %v2187, %v2189
        %2286 = vadd.xlane.f32.xlu0 %v2285
        %v2287 = vpop.xlane.xlu0 %2286
        %v2288 = vadd.f32 %v2191, %v2193
        %2289 = vadd.xlane.f32.xlu0 %v2288
        %v2290 = vpop.xlane.xlu0 %2289
        %v2291 = vadd.f32 %v2195, %v2197
        %2292 = vadd.xlane.f32.xlu0 %v2291
        %v2293 = vpop.xlane.xlu0 %2292
        %v2294 = vrcp.pop %v2200
        %v2295 = vrcp.pop %v2203
        %v2296 = vrcp.pop %v2206
        %v2297 = vrcp.pop %v2209
        %v2298 = vrcp.pop %v2212
        %v2299 = vrcp.pop %v2215
        %v2300 = vrcp.pop %v2218
        %v2301 = vrcp.pop %v2221
        %v2302 = vrcp.pop %v2224
        %v2303 = vrcp.pop %v2227
        %v2304 = vrcp.pop %v2230
        %v2305 = vrcp.pop %v2233
        %v2306 = vrcp.pop %v2236
        %v2307 = vrcp.pop %v2239
        %v2308 = vrcp.pop %v2242
        %v2309 = vrcp.pop %v2245
        %v2310 = vrcp.pop %v2248
        %v2311 = vrcp.pop %v2251
        %v2312 = vrcp.pop %v2254
        %v2313 = vrcp.pop %v2257
        %v2314 = vrcp.pop %v2260
        %v2315 = vrcp.pop %v2263
        %v2316 = vrcp.pop %v2266
        %v2317 = vrcp.pop %v2269
        %v2318 = vrcp.pop %v2272
        %v2319 = vrcp.pop %v2275
        %v2320 = vrcp.pop %v2278
        %v2321 = vrcp.pop %v2281
        %v2322 = vrcp.pop %v2284
        %v2323 = vrcp.pop %v2287
        %v2324 = vrcp.pop %v2290
        %v2325 = vrcp.pop %v2293
        %v2326 = vmul.f32 %v2071, %v2294
        %v2327 = vmul.f32 %v2073, %v2294
        %v2328 = vmul.f32 %v2075, %v2295
        %v2329 = vmul.f32 %v2077, %v2295
        %v2330 = vmul.f32 %v2079, %v2296
        %v2331 = vmul.f32 %v2081, %v2296
        %v2332 = vmul.f32 %v2083, %v2297
        %v2333 = vmul.f32 %v2085, %v2297
        %v2334 = vmul.f32 %v2087, %v2298
        %v2335 = vmul.f32 %v2089, %v2298
        %v2336 = vmul.f32 %v2091, %v2299
        %v2337 = vmul.f32 %v2093, %v2299
        %v2338 = vmul.f32 %v2095, %v2300
        %v2339 = vmul.f32 %v2097, %v2300
        %v2340 = vmul.f32 %v2099, %v2301
        %v2341 = vmul.f32 %v2101, %v2301
        %v2342 = vmul.f32 %v2103, %v2302
        %v2343 = vmul.f32 %v2105, %v2302
        %v2344 = vmul.f32 %v2107, %v2303
        %v2345 = vmul.f32 %v2109, %v2303
        %v2346 = vmul.f32 %v2111, %v2304
        %v2347 = vmul.f32 %v2113, %v2304
        %v2348 = vmul.f32 %v2115, %v2305
        %v2349 = vmul.f32 %v2117, %v2305
        %v2350 = vmul.f32 %v2119, %v2306
        %v2351 = vmul.f32 %v2121, %v2306
        %v2352 = vmul.f32 %v2123, %v2307
        %v2353 = vmul.f32 %v2125, %v2307
        %v2354 = vmul.f32 %v2127, %v2308
        %v2355 = vmul.f32 %v2129, %v2308
        %v2356 = vmul.f32 %v2131, %v2309
        %v2357 = vmul.f32 %v2133, %v2309
        %v2358 = vmul.f32 %v2135, %v2310
        %v2359 = vmul.f32 %v2137, %v2310
        %v2360 = vmul.f32 %v2139, %v2311
        %v2361 = vmul.f32 %v2141, %v2311
        %v2362 = vmul.f32 %v2143, %v2312
        %v2363 = vmul.f32 %v2145, %v2312
        %v2364 = vmul.f32 %v2147, %v2313
        %v2365 = vmul.f32 %v2149, %v2313
        %v2366 = vmul.f32 %v2151, %v2314
        %v2367 = vmul.f32 %v2153, %v2314
        %v2368 = vmul.f32 %v2155, %v2315
        %v2369 = vmul.f32 %v2157, %v2315
        %v2370 = vmul.f32 %v2159, %v2316
        %v2371 = vmul.f32 %v2161, %v2316
        %v2372 = vmul.f32 %v2163, %v2317
        %v2373 = vmul.f32 %v2165, %v2317
        %v2374 = vmul.f32 %v2167, %v2318
        %v2375 = vmul.f32 %v2169, %v2318
        %v2376 = vmul.f32 %v2171, %v2319
        %v2377 = vmul.f32 %v2173, %v2319
        %v2378 = vmul.f32 %v2175, %v2320
        %v2379 = vmul.f32 %v2177, %v2320
        %v2380 = vmul.f32 %v2179, %v2321
        %v2381 = vmul.f32 %v2181, %v2321
        %v2382 = vmul.f32 %v2183, %v2322
        %v2383 = vmul.f32 %v2185, %v2322
        %v2384 = vmul.f32 %v2187, %v2323
        %v2385 = vmul.f32 %v2189, %v2323
        %v2386 = vmul.f32 %v2191, %v2324
        %v2387 = vmul.f32 %v2193, %v2324
        %v2388 = vmul.f32 %v2195, %v2325
        %v2389 = vmul.f32 %v2197, %v2325
        %v2390 = vpack.c.bf16 %v2328, %v2326
        %v2391 = vpack.c.bf16 %v2329, %v2327
        %v2392 = vpack.c.bf16 %v2332, %v2330
        %v2393 = vpack.c.bf16 %v2333, %v2331
        %v2394 = vpack.c.bf16 %v2336, %v2334
        %v2395 = vpack.c.bf16 %v2337, %v2335
        %v2396 = vpack.c.bf16 %v2340, %v2338
        %v2397 = vpack.c.bf16 %v2341, %v2339
        %v2398 = vpack.c.bf16 %v2344, %v2342
        %v2399 = vpack.c.bf16 %v2345, %v2343
        %v2400 = vpack.c.bf16 %v2348, %v2346
        %v2401 = vpack.c.bf16 %v2349, %v2347
        %v2402 = vpack.c.bf16 %v2352, %v2350
        %v2403 = vpack.c.bf16 %v2353, %v2351
        %v2404 = vpack.c.bf16 %v2356, %v2354
        %v2405 = vpack.c.bf16 %v2357, %v2355
        %v2406 = vpack.c.bf16 %v2360, %v2358
        %v2407 = vpack.c.bf16 %v2361, %v2359
        %v2408 = vpack.c.bf16 %v2364, %v2362
        %v2409 = vpack.c.bf16 %v2365, %v2363
        %v2410 = vpack.c.bf16 %v2368, %v2366
        %v2411 = vpack.c.bf16 %v2369, %v2367
        %v2412 = vpack.c.bf16 %v2372, %v2370
        %v2413 = vpack.c.bf16 %v2373, %v2371
        %v2414 = vpack.c.bf16 %v2376, %v2374
        %v2415 = vpack.c.bf16 %v2377, %v2375
        %v2416 = vpack.c.bf16 %v2380, %v2378
        %v2417 = vpack.c.bf16 %v2381, %v2379
        %v2418 = vpack.c.bf16 %v2384, %v2382
        %v2419 = vpack.c.bf16 %v2385, %v2383
        %v2420 = vpack.c.bf16 %v2388, %v2386
        %v2421 = vpack.c.bf16 %v2389, %v2387
        %v2454 = vunpack.c.l.b16 %v1589
        %v2455 = vunpack.c.l.b16 %v1590
        %v2456 = vunpack.c.l.b16 %v1591
        %v2457 = vunpack.c.l.b16 %v1592
        %v2458 = vunpack.c.l.b16 %v1593
        %v2459 = vunpack.c.l.b16 %v1594
        %v2460 = vunpack.c.l.b16 %v1595
        %v2461 = vunpack.c.l.b16 %v1596
        %v2462 = vunpack.c.l.b16 %v1597
        %v2463 = vunpack.c.l.b16 %v1598
        %v2464 = vunpack.c.l.b16 %v1599
        %v2465 = vunpack.c.l.b16 %v1600
        %v2466 = vunpack.c.l.b16 %v1601
        %v2467 = vunpack.c.l.b16 %v1602
        %v2468 = vunpack.c.l.b16 %v1603
        %v2469 = vunpack.c.l.b16 %v1604
        %v2470 = vunpack.c.l.b16 %v1605
        %v2471 = vunpack.c.l.b16 %v1606
        %v2472 = vunpack.c.l.b16 %v1607
        %v2473 = vunpack.c.l.b16 %v1608
        %v2474 = vunpack.c.l.b16 %v1609
        %v2475 = vunpack.c.l.b16 %v1610
        %v2476 = vunpack.c.l.b16 %v1611
        %v2477 = vunpack.c.l.b16 %v1612
        %v2478 = vunpack.c.l.b16 %v1613
        %v2479 = vunpack.c.l.b16 %v1614
        %v2480 = vunpack.c.l.b16 %v1615
        %v2481 = vunpack.c.l.b16 %v1616
        %v2482 = vunpack.c.l.b16 %v1617
        %v2483 = vunpack.c.l.b16 %v1618
        %v2484 = vunpack.c.l.b16 %v1619
        %v2485 = vunpack.c.l.b16 %v1620
        %v2486 = vpack.c.b16 %v2455, %v2454
        %v2487 = vpack.c.b16 %v2457, %v2456
        %v2488 = vpack.c.b16 %v2459, %v2458
        %v2489 = vpack.c.b16 %v2461, %v2460
        %v2490 = vpack.c.b16 %v2463, %v2462
        %v2491 = vpack.c.b16 %v2465, %v2464
        %v2492 = vpack.c.b16 %v2467, %v2466
        %v2493 = vpack.c.b16 %v2469, %v2468
        %v2494 = vpack.c.b16 %v2471, %v2470
        %v2495 = vpack.c.b16 %v2473, %v2472
        %v2496 = vpack.c.b16 %v2475, %v2474
        %v2497 = vpack.c.b16 %v2477, %v2476
        %v2498 = vpack.c.b16 %v2479, %v2478
        %v2499 = vpack.c.b16 %v2481, %v2480
        %v2500 = vpack.c.b16 %v2483, %v2482
        %v2501 = vpack.c.b16 %v2485, %v2484
        %2518 = vmatprep.subr.bf16.mxu0 0
        %2519 = vmatpush1.bf16.msra.mxu0 %v2493
        %2520 = vmatprep.subr.bf16.mxu0 0
        %2521 = vmatpush1.bf16.msra.mxu0 %v2492
        %2522 = vmatprep.subr.bf16.mxu0 0
        %2523 = vmatpush1.bf16.msra.mxu0 %v2491
        %2524 = vmatprep.subr.bf16.mxu0 0
        %2525 = vmatpush1.bf16.msra.mxu0 %v2490
        %2526 = vmatprep.subr.bf16.mxu0 0
        %2527 = vmatpush1.bf16.msra.mxu0 %v2489
        %2528 = vmatprep.subr.bf16.mxu0 0
        %2529 = vmatpush1.bf16.msra.mxu0 %v2488
        %2530 = vmatprep.subr.bf16.mxu0 0
        %2531 = vmatpush1.bf16.msra.mxu0 %v2487
        %2532 = vmatprep.subr.bf16.mxu0 0
        %2533 = vmatpush1.bf16.msra.mxu0 %v2486
        %2534 = vmatprep.subr.bf16.mxu0 0
        %2535 = vmatpush2.bf16.msra.mxu0 %v2501
        %2536 = vmatprep.subr.bf16.mxu0 0
        %2537 = vmatpush2.bf16.msra.mxu0 %v2500
        %2538 = vmatprep.subr.bf16.mxu0 0
        %2539 = vmatpush2.bf16.msra.mxu0 %v2499
        %2540 = vmatprep.subr.bf16.mxu0 0
        %2541 = vmatpush2.bf16.msra.mxu0 %v2498
        %2542 = vmatprep.subr.bf16.mxu0 0
        %2543 = vmatpush2.bf16.msra.mxu0 %v2497
        %2544 = vmatprep.subr.bf16.mxu0 0
        %2545 = vmatpush2.bf16.msra.mxu0 %v2496
        %2546 = vmatprep.subr.bf16.mxu0 0
        %2547 = vmatpush2.bf16.msra.mxu0 %v2495
        %2548 = vmatprep.subr.bf16.mxu0 0
        %2549 = vmatpush2.bf16.msra.mxu0 %v2494
        %2550 = vmatprep.mubr.bf16.mxu0 %v2391
        %2551 = vmatmul.mubr.bf16.gmra.mxu0 %v2390
        %v2552 = vpop.f32.mrf.mxu0
        %v2553 = vadd.f32 0.0, %v2552
        %v2554 = vpop.f32.mrf.mxu0
        %v2555 = vpop.f32.mrf.mxu0
        %v2556 = vadd.f32 0.0, %v2555
        %v2557 = vpop.f32.mrf.mxu0
        %2558 = vmatprep.mubr.bf16.mxu0 %v2393
        %2559 = vmatmul.mubr.bf16.gmra.mxu0 %v2392
        %v2560 = vpop.f32.mrf.mxu0
        %v2561 = vadd.f32 0.0, %v2560
        %v2562 = vpop.f32.mrf.mxu0
        %v2563 = vpop.f32.mrf.mxu0
        %v2564 = vadd.f32 0.0, %v2563
        %v2565 = vpop.f32.mrf.mxu0
        %2566 = vmatprep.mubr.bf16.mxu0 %v2395
        %2567 = vmatmul.mubr.bf16.gmra.mxu0 %v2394
        %v2568 = vpop.f32.mrf.mxu0
        %v2569 = vadd.f32 0.0, %v2568
        %v2570 = vpop.f32.mrf.mxu0
        %v2571 = vpop.f32.mrf.mxu0
        %v2572 = vadd.f32 0.0, %v2571
        %v2573 = vpop.f32.mrf.mxu0
        %2574 = vmatprep.mubr.bf16.mxu0 %v2397
        %2575 = vmatmul.mubr.bf16.gmra.mxu0 %v2396
        %v2576 = vpop.f32.mrf.mxu0
        %v2577 = vadd.f32 0.0, %v2576
        %v2578 = vpop.f32.mrf.mxu0
        %v2579 = vpop.f32.mrf.mxu0
        %v2580 = vadd.f32 0.0, %v2579
        %v2581 = vpop.f32.mrf.mxu0
        %2582 = vmatprep.mubr.bf16.mxu0 %v2399
        %2583 = vmatmul.mubr.bf16.gmra.mxu0 %v2398
        %v2584 = vpop.f32.mrf.mxu0
        %v2585 = vadd.f32 0.0, %v2584
        %v2586 = vpop.f32.mrf.mxu0
        %v2587 = vpop.f32.mrf.mxu0
        %v2588 = vadd.f32 0.0, %v2587
        %v2589 = vpop.f32.mrf.mxu0
        %2590 = vmatprep.mubr.bf16.mxu0 %v2401
        %2591 = vmatmul.mubr.bf16.gmra.mxu0 %v2400
        %v2592 = vpop.f32.mrf.mxu0
        %v2593 = vadd.f32 0.0, %v2592
        %v2594 = vpop.f32.mrf.mxu0
        %v2595 = vpop.f32.mrf.mxu0
        %v2596 = vadd.f32 0.0, %v2595
        %v2597 = vpop.f32.mrf.mxu0
        %2598 = vmatprep.mubr.bf16.mxu0 %v2403
        %2599 = vmatmul.mubr.bf16.gmra.mxu0 %v2402
        %v2600 = vpop.f32.mrf.mxu0
        %v2601 = vadd.f32 0.0, %v2600
        %v2602 = vpop.f32.mrf.mxu0
        %v2603 = vpop.f32.mrf.mxu0
        %v2604 = vadd.f32 0.0, %v2603
        %v2605 = vpop.f32.mrf.mxu0
        %2606 = vmatprep.mubr.bf16.mxu0 %v2405
        %2607 = vmatmul.mubr.bf16.gmra.mxu0 %v2404
        %v2608 = vpop.f32.mrf.mxu0
        %v2609 = vadd.f32 0.0, %v2608
        %v2610 = vpop.f32.mrf.mxu0
        %v2611 = vpop.f32.mrf.mxu0
        %v2612 = vadd.f32 0.0, %v2611
        %v2613 = vpop.f32.mrf.mxu0
        %2614 = vmatprep.mubr.bf16.mxu0 %v2407
        %2615 = vmatmul.mubr.bf16.gmra.mxu0 %v2406
        %v2616 = vpop.f32.mrf.mxu0
        %v2617 = vadd.f32 0.0, %v2616
        %v2618 = vpop.f32.mrf.mxu0
        %v2619 = vpop.f32.mrf.mxu0
        %v2620 = vadd.f32 0.0, %v2619
        %v2621 = vpop.f32.mrf.mxu0
        %2622 = vmatprep.mubr.bf16.mxu0 %v2409
        %2623 = vmatmul.mubr.bf16.gmra.mxu0 %v2408
        %v2624 = vpop.f32.mrf.mxu0
        %v2625 = vadd.f32 0.0, %v2624
        %v2626 = vpop.f32.mrf.mxu0
        %v2627 = vpop.f32.mrf.mxu0
        %v2628 = vadd.f32 0.0, %v2627
        %v2629 = vpop.f32.mrf.mxu0
        %2630 = vmatprep.mubr.bf16.mxu0 %v2411
        %2631 = vmatmul.mubr.bf16.gmra.mxu0 %v2410
        %v2632 = vpop.f32.mrf.mxu0
        %v2633 = vadd.f32 0.0, %v2632
        %v2634 = vpop.f32.mrf.mxu0
        %v2635 = vpop.f32.mrf.mxu0
        %v2636 = vadd.f32 0.0, %v2635
        %v2637 = vpop.f32.mrf.mxu0
        %2638 = vmatprep.mubr.bf16.mxu0 %v2413
        %2639 = vmatmul.mubr.bf16.gmra.mxu0 %v2412
        %v2640 = vpop.f32.mrf.mxu0
        %v2641 = vadd.f32 0.0, %v2640
        %v2642 = vpop.f32.mrf.mxu0
        %v2643 = vpop.f32.mrf.mxu0
        %v2644 = vadd.f32 0.0, %v2643
        %v2645 = vpop.f32.mrf.mxu0
        %2646 = vmatprep.mubr.bf16.mxu0 %v2415
        %2647 = vmatmul.mubr.bf16.gmra.mxu0 %v2414
        %v2648 = vpop.f32.mrf.mxu0
        %v2649 = vadd.f32 0.0, %v2648
        %v2650 = vpop.f32.mrf.mxu0
        %v2651 = vpop.f32.mrf.mxu0
        %v2652 = vadd.f32 0.0, %v2651
        %v2653 = vpop.f32.mrf.mxu0
        %2654 = vmatprep.mubr.bf16.mxu0 %v2417
        %2655 = vmatmul.mubr.bf16.gmra.mxu0 %v2416
        %v2656 = vpop.f32.mrf.mxu0
        %v2657 = vadd.f32 0.0, %v2656
        %v2658 = vpop.f32.mrf.mxu0
        %v2659 = vpop.f32.mrf.mxu0
        %v2660 = vadd.f32 0.0, %v2659
        %v2661 = vpop.f32.mrf.mxu0
        %2662 = vmatprep.mubr.bf16.mxu0 %v2419
        %2663 = vmatmul.mubr.bf16.gmra.mxu0 %v2418
        %v2664 = vpop.f32.mrf.mxu0
        %v2665 = vadd.f32 0.0, %v2664
        %v2666 = vpop.f32.mrf.mxu0
        %v2667 = vpop.f32.mrf.mxu0
        %v2668 = vadd.f32 0.0, %v2667
        %v2669 = vpop.f32.mrf.mxu0
        %2670 = vmatprep.mubr.bf16.mxu0 %v2421
        %2671 = vmatmul.mubr.bf16.gmra.mxu0 %v2420
        %v2672 = vpop.f32.mrf.mxu0
        %v2673 = vadd.f32 0.0, %v2672
        %v2674 = vpop.f32.mrf.mxu0
        %v2675 = vpop.f32.mrf.mxu0
        %v2676 = vadd.f32 0.0, %v2675
        %v2677 = vpop.f32.mrf.mxu0
        %2678 = vdwg.mxu0
        %v2679 = vpack.c.bf16 %v2556, %v2553
        %v2680 = vpack.c.bf16 %v2564, %v2561
        %v2681 = vpack.c.bf16 %v2572, %v2569
        %v2682 = vpack.c.bf16 %v2580, %v2577
        %v2683 = vpack.c.bf16 %v2588, %v2585
        %v2684 = vpack.c.bf16 %v2596, %v2593
        %v2685 = vpack.c.bf16 %v2604, %v2601
        %v2686 = vpack.c.bf16 %v2612, %v2609
        %v2687 = vpack.c.bf16 %v2620, %v2617
        %v2688 = vpack.c.bf16 %v2628, %v2625
        %v2689 = vpack.c.bf16 %v2636, %v2633
        %v2690 = vpack.c.bf16 %v2644, %v2641
        %v2691 = vpack.c.bf16 %v2652, %v2649
        %v2692 = vpack.c.bf16 %v2660, %v2657
        %v2693 = vpack.c.bf16 %v2668, %v2665
        %v2694 = vpack.c.bf16 %v2676, %v2673
        %v2695 = vld [vmem:[#allocation12] sm:$0xf]
        %v2696 = vld [vmem:[#allocation12 + $0x4] sm:$0xf]
        %v2697 = vld [vmem:[#allocation12 + $0x8] sm:$0xf]
        %v2698 = vld [vmem:[#allocation12 + $0xc] sm:$0xf]
        %v2699 = vld [vmem:[#allocation12 + $0x10] sm:$0xf]
        %v2700 = vld [vmem:[#allocation12 + $0x14] sm:$0xf]
        %v2701 = vld [vmem:[#allocation12 + $0x18] sm:$0xf]
        %v2702 = vld [vmem:[#allocation12 + $0x1c] sm:$0xf]
        %v2703 = vld [vmem:[#allocation12 + $0x20] sm:$0xf]
        %v2704 = vld [vmem:[#allocation12 + $0x24] sm:$0xf]
        %v2705 = vld [vmem:[#allocation12 + $0x28] sm:$0xf]
        %v2706 = vld [vmem:[#allocation12 + $0x2c] sm:$0xf]
        %v2707 = vld [vmem:[#allocation12 + $0x30] sm:$0xf]
        %v2708 = vld [vmem:[#allocation12 + $0x34] sm:$0xf]
        %v2709 = vld [vmem:[#allocation12 + $0x38] sm:$0xf]
        %v2710 = vld [vmem:[#allocation12 + $0x3c] sm:$0xf]
        %v2711 = vld [vmem:[%s7] sm:$0x1]
        %v2713 = vlaneseq
        %v2714 = vshrl.u32 %v2713, 7
        %v2715 = vsub.s32 0, %v2714
        %v2716 = vrot.slane %v2711, %v2715
        %v2734 = vunpack.c.l.b16 %v2695
        %v2735 = vunpack.c.l.b16 %v2696
        %v2736 = vunpack.c.l.b16 %v2697
        %v2737 = vunpack.c.l.b16 %v2698
        %v2738 = vunpack.c.l.b16 %v2699
        %v2739 = vunpack.c.l.b16 %v2700
        %v2740 = vunpack.c.l.b16 %v2701
        %v2741 = vunpack.c.l.b16 %v2702
        %v2742 = vunpack.c.l.b16 %v2703
        %v2743 = vunpack.c.l.b16 %v2704
        %v2744 = vunpack.c.l.b16 %v2705
        %v2745 = vunpack.c.l.b16 %v2706
        %v2746 = vunpack.c.l.b16 %v2707
        %v2747 = vunpack.c.l.b16 %v2708
        %v2748 = vunpack.c.l.b16 %v2709
        %v2749 = vunpack.c.l.b16 %v2710
        %v2750 = vpack.c.b16 %v2735, %v2734
        %v2751 = vpack.c.b16 %v2737, %v2736
        %v2752 = vpack.c.b16 %v2739, %v2738
        %v2753 = vpack.c.b16 %v2741, %v2740
        %v2754 = vpack.c.b16 %v2743, %v2742
        %v2755 = vpack.c.b16 %v2745, %v2744
        %v2756 = vpack.c.b16 %v2747, %v2746
        %v2757 = vpack.c.b16 %v2749, %v2748
        %2766 = vmatprep.subr.bf16.mxu0 0
        %2767 = vmatpush1.bf16.msra.mxu0 %v2757
        %2768 = vmatprep.subr.bf16.mxu0 0
        %2769 = vmatpush1.bf16.msra.mxu0 %v2756
        %2770 = vmatprep.subr.bf16.mxu0 0
        %2771 = vmatpush1.bf16.msra.mxu0 %v2755
        %2772 = vmatprep.subr.bf16.mxu0 0
        %2773 = vmatpush1.bf16.msra.mxu0 %v2754
        %2774 = vmatprep.subr.bf16.mxu0 0
        %2775 = vmatpush1.bf16.msra.mxu0 %v2753
        %2776 = vmatprep.subr.bf16.mxu0 0
        %2777 = vmatpush1.bf16.msra.mxu0 %v2752
        %2778 = vmatprep.subr.bf16.mxu0 0
        %2779 = vmatpush1.bf16.msra.mxu0 %v2751
        %2780 = vmatprep.subr.bf16.mxu0 0
        %2781 = vmatpush1.bf16.msra.mxu0 %v2750
        %2782 = vmatprep.subr.bf16.mxu0 0
        %2783 = vmatpush2.bf16.msra.mxu0 0
        %2784 = vmatprep.subr.bf16.mxu0 0
        %2785 = vmatpush2.bf16.msra.mxu0 0
        %2786 = vmatprep.subr.bf16.mxu0 0
        %2787 = vmatpush2.bf16.msra.mxu0 0
        %2788 = vmatprep.subr.bf16.mxu0 0
        %2789 = vmatpush2.bf16.msra.mxu0 0
        %2790 = vmatprep.subr.bf16.mxu0 0
        %2791 = vmatpush2.bf16.msra.mxu0 0
        %2792 = vmatprep.subr.bf16.mxu0 0
        %2793 = vmatpush2.bf16.msra.mxu0 0
        %2794 = vmatprep.subr.bf16.mxu0 0
        %2795 = vmatpush2.bf16.msra.mxu0 0
        %2796 = vmatprep.subr.bf16.mxu0 0
        %2797 = vmatpush2.bf16.msra.mxu0 0
        %2798 = vmatprep.mubr.bf16.mxu0 0
        %2799 = vmatmul.mubr.bf16.gmra.mxu0 %v2679
        %v2800 = vpop.f32.mrf.mxu0
        %v2801 = vadd.f32 %v2716, %v2800
        %v2802 = vpop.f32.mrf.mxu0
        %v2803 = vpop.f32.mrf.mxu0
        %v2804 = vadd.f32 %v2716, %v2803
        %v2805 = vpop.f32.mrf.mxu0
        %2806 = vmatprep.mubr.bf16.mxu0 0
        %2807 = vmatmul.mubr.bf16.gmra.mxu0 %v2680
        %v2808 = vpop.f32.mrf.mxu0
        %v2809 = vadd.f32 %v2716, %v2808
        %v2810 = vpop.f32.mrf.mxu0
        %v2811 = vpop.f32.mrf.mxu0
        %v2812 = vadd.f32 %v2716, %v2811
        %v2813 = vpop.f32.mrf.mxu0
        %2814 = vmatprep.mubr.bf16.mxu0 0
        %2815 = vmatmul.mubr.bf16.gmra.mxu0 %v2681
        %v2816 = vpop.f32.mrf.mxu0
        %v2817 = vadd.f32 %v2716, %v2816
        %v2818 = vpop.f32.mrf.mxu0
        %v2819 = vpop.f32.mrf.mxu0
        %v2820 = vadd.f32 %v2716, %v2819
        %v2821 = vpop.f32.mrf.mxu0
        %2822 = vmatprep.mubr.bf16.mxu0 0
        %2823 = vmatmul.mubr.bf16.gmra.mxu0 %v2682
        %v2824 = vpop.f32.mrf.mxu0
        %v2825 = vadd.f32 %v2716, %v2824
        %v2826 = vpop.f32.mrf.mxu0
        %v2827 = vpop.f32.mrf.mxu0
        %v2828 = vadd.f32 %v2716, %v2827
        %v2829 = vpop.f32.mrf.mxu0
        %2830 = vmatprep.mubr.bf16.mxu0 0
        %2831 = vmatmul.mubr.bf16.gmra.mxu0 %v2683
        %v2832 = vpop.f32.mrf.mxu0
        %v2833 = vadd.f32 %v2716, %v2832
        %v2834 = vpop.f32.mrf.mxu0
        %v2835 = vpop.f32.mrf.mxu0
        %v2836 = vadd.f32 %v2716, %v2835
        %v2837 = vpop.f32.mrf.mxu0
        %2838 = vmatprep.mubr.bf16.mxu0 0
        %2839 = vmatmul.mubr.bf16.gmra.mxu0 %v2684
        %v2840 = vpop.f32.mrf.mxu0
        %v2841 = vadd.f32 %v2716, %v2840
        %v2842 = vpop.f32.mrf.mxu0
        %v2843 = vpop.f32.mrf.mxu0
        %v2844 = vadd.f32 %v2716, %v2843
        %v2845 = vpop.f32.mrf.mxu0
        %2846 = vmatprep.mubr.bf16.mxu0 0
        %2847 = vmatmul.mubr.bf16.gmra.mxu0 %v2685
        %v2848 = vpop.f32.mrf.mxu0
        %v2849 = vadd.f32 %v2716, %v2848
        %v2850 = vpop.f32.mrf.mxu0
        %v2851 = vpop.f32.mrf.mxu0
        %v2852 = vadd.f32 %v2716, %v2851
        %v2853 = vpop.f32.mrf.mxu0
        %2854 = vmatprep.mubr.bf16.mxu0 0
        %2855 = vmatmul.mubr.bf16.gmra.mxu0 %v2686
        %v2856 = vpop.f32.mrf.mxu0
        %v2857 = vadd.f32 %v2716, %v2856
        %v2858 = vpop.f32.mrf.mxu0
        %v2859 = vpop.f32.mrf.mxu0
        %v2860 = vadd.f32 %v2716, %v2859
        %v2861 = vpop.f32.mrf.mxu0
        %2862 = vmatprep.mubr.bf16.mxu0 0
        %2863 = vmatmul.mubr.bf16.gmra.mxu0 %v2687
        %v2864 = vpop.f32.mrf.mxu0
        %v2865 = vadd.f32 %v2716, %v2864
        %v2866 = vpop.f32.mrf.mxu0
        %v2867 = vpop.f32.mrf.mxu0
        %v2868 = vadd.f32 %v2716, %v2867
        %v2869 = vpop.f32.mrf.mxu0
        %2870 = vmatprep.mubr.bf16.mxu0 0
        %2871 = vmatmul.mubr.bf16.gmra.mxu0 %v2688
        %v2872 = vpop.f32.mrf.mxu0
        %v2873 = vadd.f32 %v2716, %v2872
        %v2874 = vpop.f32.mrf.mxu0
        %v2875 = vpop.f32.mrf.mxu0
        %v2876 = vadd.f32 %v2716, %v2875
        %v2877 = vpop.f32.mrf.mxu0
        %2878 = vmatprep.mubr.bf16.mxu0 0
        %2879 = vmatmul.mubr.bf16.gmra.mxu0 %v2689
        %v2880 = vpop.f32.mrf.mxu0
        %v2881 = vadd.f32 %v2716, %v2880
        %v2882 = vpop.f32.mrf.mxu0
        %v2883 = vpop.f32.mrf.mxu0
        %v2884 = vadd.f32 %v2716, %v2883
        %v2885 = vpop.f32.mrf.mxu0
        %2886 = vmatprep.mubr.bf16.mxu0 0
        %2887 = vmatmul.mubr.bf16.gmra.mxu0 %v2690
        %v2888 = vpop.f32.mrf.mxu0
        %v2889 = vadd.f32 %v2716, %v2888
        %v2890 = vpop.f32.mrf.mxu0
        %v2891 = vpop.f32.mrf.mxu0
        %v2892 = vadd.f32 %v2716, %v2891
        %v2893 = vpop.f32.mrf.mxu0
        %2894 = vmatprep.mubr.bf16.mxu0 0
        %2895 = vmatmul.mubr.bf16.gmra.mxu0 %v2691
        %v2896 = vpop.f32.mrf.mxu0
        %v2897 = vadd.f32 %v2716, %v2896
        %v2898 = vpop.f32.mrf.mxu0
        %v2899 = vpop.f32.mrf.mxu0
        %v2900 = vadd.f32 %v2716, %v2899
        %v2901 = vpop.f32.mrf.mxu0
        %2902 = vmatprep.mubr.bf16.mxu0 0
        %2903 = vmatmul.mubr.bf16.gmra.mxu0 %v2692
        %v2904 = vpop.f32.mrf.mxu0
        %v2905 = vadd.f32 %v2716, %v2904
        %v2906 = vpop.f32.mrf.mxu0
        %v2907 = vpop.f32.mrf.mxu0
        %v2908 = vadd.f32 %v2716, %v2907
        %v2909 = vpop.f32.mrf.mxu0
        %2910 = vmatprep.mubr.bf16.mxu0 0
        %2911 = vmatmul.mubr.bf16.gmra.mxu0 %v2693
        %v2912 = vpop.f32.mrf.mxu0
        %v2913 = vadd.f32 %v2716, %v2912
        %v2914 = vpop.f32.mrf.mxu0
        %v2915 = vpop.f32.mrf.mxu0
        %v2916 = vadd.f32 %v2716, %v2915
        %v2917 = vpop.f32.mrf.mxu0
        %2918 = vmatprep.mubr.bf16.mxu0 0
        %2919 = vmatmul.mubr.bf16.gmra.mxu0 %v2694
        %v2920 = vpop.f32.mrf.mxu0
        %v2921 = vadd.f32 %v2716, %v2920
        %v2922 = vpop.f32.mrf.mxu0
        %v2923 = vpop.f32.mrf.mxu0
        %v2924 = vadd.f32 %v2716, %v2923
        %v2925 = vpop.f32.mrf.mxu0
        %2926 = vdwg.mxu0
        %2927 = vst [vmem:[%s424] sm:$0xff] %v2801
        %2928 = vst [vmem:[%s424 + $0x8] sm:$0xff] %v2804
        %2929 = vst [vmem:[%s424 + $0x10] sm:$0xff] %v2809
        %2930 = vst [vmem:[%s424 + $0x18] sm:$0xff] %v2812
        %2931 = vst [vmem:[%s424 + $0x20] sm:$0xff] %v2817
        %2932 = vst [vmem:[%s424 + $0x28] sm:$0xff] %v2820
        %2933 = vst [vmem:[%s424 + $0x30] sm:$0xff] %v2825
        %2934 = vst [vmem:[%s424 + $0x38] sm:$0xff] %v2828
        %2935 = vst [vmem:[%s424 + $0x40] sm:$0xff] %v2833
        %2936 = vst [vmem:[%s424 + $0x48] sm:$0xff] %v2836
        %2937 = vst [vmem:[%s424 + $0x50] sm:$0xff] %v2841
        %2938 = vst [vmem:[%s424 + $0x58] sm:$0xff] %v2844
        %2939 = vst [vmem:[%s424 + $0x60] sm:$0xff] %v2849
        %2940 = vst [vmem:[%s424 + $0x68] sm:$0xff] %v2852
        %2941 = vst [vmem:[%s424 + $0x70] sm:$0xff] %v2857
        %2942 = vst [vmem:[%s424 + $0x78] sm:$0xff] %v2860
        %2943 = vst [vmem:[%s424 + $0x80] sm:$0xff] %v2865
        %2944 = vst [vmem:[%s424 + $0x88] sm:$0xff] %v2868
        %2945 = vst [vmem:[%s424 + $0x90] sm:$0xff] %v2873
        %2946 = vst [vmem:[%s424 + $0x98] sm:$0xff] %v2876
        %2947 = vst [vmem:[%s424 + $0xa0] sm:$0xff] %v2881
        %2948 = vst [vmem:[%s424 + $0xa8] sm:$0xff] %v2884
        %2949 = vst [vmem:[%s424 + $0xb0] sm:$0xff] %v2889
        %2950 = vst [vmem:[%s424 + $0xb8] sm:$0xff] %v2892
        %2951 = vst [vmem:[%s424 + $0xc0] sm:$0xff] %v2897
        %2952 = vst [vmem:[%s424 + $0xc8] sm:$0xff] %v2900
        %2953 = vst [vmem:[%s424 + $0xd0] sm:$0xff] %v2905
        %2954 = vst [vmem:[%s424 + $0xd8] sm:$0xff] %v2908
        %2955 = vst [vmem:[%s424 + $0xe0] sm:$0xff] %v2913
        %2956 = vst [vmem:[%s424 + $0xe8] sm:$0xff] %v2916
        %2957 = vst [vmem:[%s424 + $0xf0] sm:$0xff] %v2921
        %2958 = vst [vmem:[%s424 + $0xf8] sm:$0xff] %v2924
        %s2959 = sand.u32 %s231, 1
        %s2960 = scalar_lea.sflag [#allocation6], %s2959
        %s2961 = sand.u32 %s231, 1
        %s2962 = smul.addr %s2961, 256
        %s2963 = scalar_lea.vmem [#allocation13], %s2962
        // Predicated region
        $region77: #{tpu_custom_call.1} parent=51 // pred_check
          %p2964 = pneg %p241
        $region78: #{tpu_custom_call.1} parent=51 // pred_check_branch
          %2966 = sbr.rel (%p2964) target = $region80
        $region79: #{tpu_custom_call.1} parent=51 // pred_region
          %s2967 = smul.u32 32, %s34
          %s2969 = ssub.s32 4096, 4096
          %2970 = vsyncadd %s2960, %s2969
          %s2971 = smul.addr %s33, 32
          %s2972 = sadd.s32 %s2967, %s2971
          %s2973 = smul.addr %s2972, 128
          %s2974 = scalar_lea.hbm %s8, %s2973
          %s2975 = sshll.u32 %s2963, 4
          %s2976 = int_to_ptr.vmem [resolvable:$true] %s2975
          %2981 = dma.vmem_to_hbm [thread:$0]  %s2976, 4096, %s2974, %s2960, 128, 128, 8
        $region80: #{tpu_custom_call.1} parent=51 // pred_fallthru
          _
      $region52: #{tpu_custom_call.1} parent=5 // pred_fallthru
        _
      %p2982 = scmp.le.s32.totalorder 2, %s24
      // Predicated region
      $region81: #{tpu_custom_call.1} parent=5 // pred_check
        %p2983 = pneg %p2982
      $region82: #{tpu_custom_call.1} parent=5 // pred_check_branch
        %2985 = sbr.rel (%p2983) target = $region84
      $region83: #{tpu_custom_call.1} parent=5 // pred_region
        %s2986 = ssub.s32 %s24, 2
        // Predicated region
        $region85: #{tpu_custom_call.1} parent=83 // pred_check
          %p2987 = pneg %p247
        $region86: #{tpu_custom_call.1} parent=83 // pred_check_branch
          %2989 = sbr.rel (%p2987) target = $region88
        $region87: #{tpu_custom_call.1} parent=83 // pred_region
          %s2990 = sand.u32 %s232, 1
          %s2991 = scalar_lea.sflag [#allocation6], %s2990
          %s2992 = sand.u32 %s232, 1
          %s2993 = smul.addr %s2992, 256
          %s2994 = scalar_lea.vmem [#allocation13], %s2993
          %2995 = dma.done %s2991, 4096
        $region88: #{tpu_custom_call.1} parent=83 // pred_fallthru
          _
      $region84: #{tpu_custom_call.1} parent=5 // pred_fallthru
        _
    $region6: #{tpu_custom_call.1} parent=1 // loop_footer
      %s28 = sadd.s32 1, %s24
    $region7: #{tpu_custom_call.1} parent=1 // loop_footer_branch
      %23 = sbr.rel target = $region3
    $region8: #{tpu_custom_call.1} parent=1 // loop_exit
      _
    %2996 = vsyncpa [#allocation5], 1
    %s2997 = scalar_lea.sflag [#allocation5], 1
    %2998 = vsyncpa %s2997, 1
    %2999 = vsyncpa [#allocation8], 1
    %s3000 = scalar_lea.sflag [#allocation8], 1
    %3001 = vsyncpa %s3000, 1
    %3002 = vsyncpa [#allocation11], 1
    %3003 = vsyncpa [#allocation6], 1
    %s3004 = scalar_lea.sflag [#allocation6], 1
    %3005 = vsyncpa %s3004, 1

</llo_original>
